<compile_context>
chip_gen: v7x
topology: tpu7x:2x2x1
jax: 0.10.0
libtpu: 0.0.40
codegen_flags: <defaults>
</compile_context>

<pallas_src>
import functools

import jax
import jax.numpy as jnp
from jax.experimental import pallas as pl
from jax.experimental.pallas import tpu as pltpu


def _round_up(x, m):
    return ((x + m - 1) // m) * m


# --------------------------------------------------------------------------
# Pallas kernel: one (batch, pixel-tile) block per grid step.
# --------------------------------------------------------------------------
def _fullspatial_kernel(img_ref, lut_ref, o_ref, *, rx, ry, rz):
    # img_ref: (1, 3, TILE_P)      float32, channel-major pixels (~[0, 1])
    # lut_ref: (1, 3*rx, ry*rz)    float32, LUT: row = c*rx + x, col = y*rz + z
    # o_ref:   (1, 3, TILE_P)      float32
    img = img_ref[0]                           # (3, TILE_P)
    lut = lut_ref[0]                           # (3*rx, ry*rz)
    ryz = ry * rz

    # Per-channel scale by Python scalars (no captured jnp array constants).
    sx = img[0:1, :] * (rx - 1.0)              # (1, TILE_P)
    sy = img[1:2, :] * (ry - 1.0)
    sz = img[2:3, :] * (rz - 1.0)

    flx, fly, flz = jnp.floor(sx), jnp.floor(sy), jnp.floor(sz)
    fx, fy, fz = sx - flx, sy - fly, sz - flz          # == torch `% 1`
    ix = flx.astype(jnp.int32)
    iy = fly.astype(jnp.int32)
    iz = flz.astype(jnp.int32)

    # Axis coordinates as tiny (R, 1) columns (never on the (R, TILE_P) plane);
    # shifts/masks for power-of-two resolutions, div/mod fallback otherwise.
    r = jax.lax.broadcasted_iota(jnp.int32, (ryz, 1), 0)
    if (rz & (rz - 1)) == 0:
        y_col = r >> (rz.bit_length() - 1)
        z_col = r & (rz - 1)
    else:
        y_col = r // rz
        z_col = r % rz
    x_col = jax.lax.broadcasted_iota(jnp.int32, (rx, 1), 0)

    def axis_weight(col, idx, frac, res):
        # Two-nonzero per-axis linear weight; edge clamping identical to the
        # reference.  When lo == hi (clamped) the two terms SUM to 1*frac-free
        # weight — keep this summed form, do not "simplify" to a nested where.
        lo = jnp.clip(idx, 0, res - 1)                  # (1, TILE_P)
        hi = jnp.clip(idx + 1, 0, res - 1)              # (1, TILE_P)
        return (jnp.where(col == lo, 1.0 - frac, 0.0)
                + jnp.where(col == hi, frac, 0.0))      # (len(col), TILE_P)

    w_yz = (axis_weight(y_col, iy, fy, ry)
            * axis_weight(z_col, iz, fz, rz))           # (ry*rz, TILE_P)
    w_x = axis_weight(x_col, ix, fx, rx)                # (rx,    TILE_P)

    # Gather + (y,z) bilinear blend as one small matmul.  HIGHEST precision is
    # essentially free here (M = 3*rx rows on an otherwise-idle MXU) and keeps
    # the result effectively exact f32.
    t = jnp.dot(lut, w_yz, preferred_element_type=jnp.float32,
                precision=jax.lax.Precision.HIGHEST)    # (3*rx, TILE_P)

    # Finish the x contraction: elementwise multiply + rx-term sublane sum.
    outs = []
    for c in range(3):                                  # static unroll
        t_c = t[c * rx:(c + 1) * rx, :]                 # (rx, TILE_P), aligned
        outs.append(jnp.sum(t_c * w_x, axis=0, keepdims=True))   # (1, TILE_P)
    o_ref[0] = jnp.concatenate(outs, axis=0).astype(o_ref.dtype)


# --------------------------------------------------------------------------
# Wrapper (layout plumbing only; no full-image HBM transposes)
# --------------------------------------------------------------------------
def full_spatial_forward(imgs_nchw, xform_params, *, resolution_x=8,
                         resolution_y=8, resolution_z=8, tile_pixels=2048):
    """imgs_nchw: (N, 3, W, H); xform_params: (N, rx, ry, rz, 3)."""
    N, C, W, H = imgs_nchw.shape
    assert C == 3, "FullSpatial operates on 3-channel color images"
    rx, ry, rz = resolution_x, resolution_y, resolution_z
    WH = W * H
    R3 = rx * ry * rz
    RYZ = ry * rz

    # Channel-major image slab: pure reshape, no transpose.
    imgs_cm = imgs_nchw.reshape(N, 3, WH).astype(jnp.float32)
    # LUT -> channel-major (N, 3, R3), then split the flat (x, y, z) index into
    # rows (c, x) and columns (y, z).  Tiny array; transpose/reshape negligible.
    lut_cm = jnp.transpose(
        xform_params.reshape(N, R3, 3).astype(jnp.float32), (0, 2, 1))
    lut_cm = lut_cm.reshape(N, 3 * rx, RYZ)

    # Pixel tiling: lane-dense tiles (multiple of 128).
    tile_p = min(_round_up(WH, 128), _round_up(tile_pixels, 128))
    padded_wh = _round_up(WH, tile_p)
    if padded_wh != WH:
        # Zero-padded pixels hit LUT[0,0,0] (finite, harmless); sliced off below.
        imgs_cm = jnp.pad(imgs_cm, ((0, 0), (0, 0), (0, padded_wh - WH)))

    kernel = functools.partial(_fullspatial_kernel, rx=rx, ry=ry, rz=rz)

    out = pl.pallas_call(
        kernel,
        out_shape=jax.ShapeDtypeStruct((N, 3, padded_wh), jnp.float32),
        grid_spec=pltpu.PrefetchScalarGridSpec(
            num_scalar_prefetch=0,
            grid=(N, padded_wh // tile_p),
            in_specs=[
                pl.BlockSpec((1, 3, tile_p), lambda n, p: (n, 0, p)),
                pl.BlockSpec((1, 3 * rx, RYZ), lambda n, p: (n, 0, 0)),  # LUT resident
            ],
            out_specs=pl.BlockSpec((1, 3, tile_p), lambda n, p: (n, 0, p)),
        ),
        compiler_params=pltpu.CompilerParams(
            dimension_semantics=("parallel", "parallel"),
            vmem_limit_bytes=32 * 1024 * 1024),
    )(imgs_cm, lut_cm)

    # Pure reshape back to NCHW (no permute needed in channel-major layout).
    return out[:, :, :WH].reshape(N, 3, W, H)


# --------------------------------------------------------------------------
# Parameter construction (mirrors FullSpatial.construct_identity_params)
# --------------------------------------------------------------------------
def construct_identity_params(batch_size, rx, ry, rz):
    gx = jnp.arange(rx, dtype=jnp.float32) / (rx - 1)
    gy = jnp.arange(ry, dtype=jnp.float32) / (ry - 1)
    gz = jnp.arange(rz, dtype=jnp.float32) / (rz - 1)
    grid = jnp.stack(jnp.meshgrid(gx, gy, gz, indexing="ij"), axis=-1)
    return jnp.broadcast_to(grid[None], (batch_size, rx, ry, rz, 3))


# --------------------------------------------------------------------------
# Pure-JAX reference (exact gather) for correctness check
# --------------------------------------------------------------------------
def _reference(imgs_nchw, params, rx, ry, rz):
    N, C, W, H = imgs_nchw.shape
    x = jnp.transpose(imgs_nchw, (0, 2, 3, 1)).astype(jnp.float32)
    scaled = x * jnp.array([rx - 1, ry - 1, rz - 1], jnp.float32)
    ip = jnp.floor(scaled).astype(jnp.int32)
    fr = scaled - jnp.floor(scaled)
    plist = params.reshape(N, -1, 3).astype(jnp.float32)

    def corner(dx, dy, dz):
        cx = jnp.clip(ip[..., 0] + dx, 0, rx - 1)
        cy = jnp.clip(ip[..., 1] + dy, 0, ry - 1)
        cz = jnp.clip(ip[..., 2] + dz, 0, rz - 1)
        flat = (cx * ry + cy) * rz + cz                       # (N, W, H)
        g = jnp.take_along_axis(plist, flat.reshape(N, -1, 1), axis=1)
        return g.reshape(N, W, H, 3)

    eps = []
    for dx in (0, 1):
        cs = []
        for dy in (0, 1):
            v0, v1 = corner(dx, dy, 0), corner(dx, dy, 1)
            cs.append(v0 * (1 - fr[..., 2:3]) + v1 * fr[..., 2:3])
        eps.append(cs[0] * (1 - fr[..., 1:2]) + cs[1] * fr[..., 1:2])
    res = eps[0] * (1 - fr[..., 0:1]) + eps[1] * fr[..., 0:1]
    return jnp.transpose(res, (0, 3, 1, 2))


if __name__ == "__main__":
    rx = ry = rz = 8
    key = jax.random.PRNGKey(0)

    # Two small cases: one tile-aligned, one exercising the pixel-padding path.
    for (N, C, W, H) in [(2, 3, 16, 16), (2, 3, 20, 13)]:
        key, k_img, k_par = jax.random.split(key, 3)

        # images in [0, 1], NCHW like the PyTorch module's input
        imgs = jax.random.uniform(k_img, (N, C, W, H), dtype=jnp.float32)

        # deterministic params: identity LUT plus a small perturbation
        identity_params = construct_identity_params(N, rx, ry, rz)
        xform_params = jnp.clip(
            identity_params
            + 0.02 * jax.random.normal(k_par, identity_params.shape, jnp.float32),
            0.0, 1.0)

        out = full_spatial_forward(imgs, xform_params,
                                   resolution_x=rx, resolution_y=ry,
                                   resolution_z=rz)
        out = jax.block_until_ready(out)

        ref = _reference(imgs, xform_params, rx, ry, rz)
        assert out.shape == (N, C, W, H)
        # With precision=HIGHEST on the gather matmul the kernel matches the
        # exact-gather reference to ~1e-6; 2e-3 still flags any indexing or
        # blending bug (which would produce O(0.01 - 0.1) errors).
        assert jnp.allclose(out, ref, atol=2e-3, rtol=0.0), \
            f"mismatch vs reference for shape {(N, C, W, H)}"

    print("KERNEL_OK")
</pallas_src>

<mosaic_0001>
module attributes {stable_mosaic.version = 11 : i64} {
  func.func @_fullspatial_kernel(%arg0: i32, %arg1: i32, %arg2: memref<1x3x256xf32, #tpu.memory_space<vmem>>, %arg3: memref<1x24x64xf32, #tpu.memory_space<vmem>>, %arg4: memref<1x3x256xf32, #tpu.memory_space<vmem>>) attributes {dimension_semantics = [#tpu.dimension_semantics<parallel>, #tpu.dimension_semantics<parallel>], iteration_bounds = array<i64: 2, 1>, scalar_prefetch = 0 : i64, scratch_operands = 0 : i64, tpu.core_type = #tpu.core_type<tc>, window_params = [{transform_indices = @transform_0, window_bounds = array<i64: 1, 3, 256>}, {transform_indices = @transform_1, window_bounds = array<i64: 1, 24, 64>}, {transform_indices = @transform_2, window_bounds = array<i64: 1, 3, 256>}]} {
    %c0 = arith.constant 0 : index
    %c0_0 = arith.constant 0 : index
    %c0_1 = arith.constant 0 : index
    %0 = vector.load %arg2[%c0, %c0_0, %c0_1] : memref<1x3x256xf32, #tpu.memory_space<vmem>>, vector<1x3x256xf32>
    %1 = vector.shape_cast %0 : vector<1x3x256xf32> to vector<3x256xf32>
    %c0_2 = arith.constant 0 : index
    %c0_3 = arith.constant 0 : index
    %c0_4 = arith.constant 0 : index
    %2 = vector.load %arg3[%c0_2, %c0_3, %c0_4] : memref<1x24x64xf32, #tpu.memory_space<vmem>>, vector<1x24x64xf32>
    %3 = vector.shape_cast %2 : vector<1x24x64xf32> to vector<24x64xf32>
    %4 = vector.extract_strided_slice %1 {offsets = [0, 0], sizes = [1, 256], strides = [1, 1]} : vector<3x256xf32> to vector<1x256xf32>
    %cst = arith.constant 7.000000e+00 : f32
    %5 = vector.broadcast %cst : f32 to vector<1x256xf32>
    %6 = arith.mulf %4, %5 : vector<1x256xf32>
    %7 = vector.extract_strided_slice %1 {offsets = [1, 0], sizes = [1, 256], strides = [1, 1]} : vector<3x256xf32> to vector<1x256xf32>
    %cst_5 = arith.constant 7.000000e+00 : f32
    %8 = vector.broadcast %cst_5 : f32 to vector<1x256xf32>
    %9 = arith.mulf %7, %8 : vector<1x256xf32>
    %10 = vector.extract_strided_slice %1 {offsets = [2, 0], sizes = [1, 256], strides = [1, 1]} : vector<3x256xf32> to vector<1x256xf32>
    %cst_6 = arith.constant 7.000000e+00 : f32
    %11 = vector.broadcast %cst_6 : f32 to vector<1x256xf32>
    %12 = arith.mulf %10, %11 : vector<1x256xf32>
    %13 = math.floor %6 : vector<1x256xf32>
    %14 = math.floor %9 : vector<1x256xf32>
    %15 = math.floor %12 : vector<1x256xf32>
    %16 = arith.subf %6, %13 : vector<1x256xf32>
    %17 = arith.subf %9, %14 : vector<1x256xf32>
    %18 = arith.subf %12, %15 : vector<1x256xf32>
    %19 = arith.fptosi %13 : vector<1x256xf32> to vector<1x256xi32>
    %20 = arith.fptosi %14 : vector<1x256xf32> to vector<1x256xi32>
    %21 = arith.fptosi %15 : vector<1x256xf32> to vector<1x256xi32>
    %22 = tpu.iota {dimensions = array<i32: 0>} : vector<64x1xi32>
    %c3_i32 = arith.constant 3 : i32
    %23 = vector.broadcast %c3_i32 : i32 to vector<64x1xi32>
    %24 = arith.shrsi %22, %23 : vector<64x1xi32>
    %c7_i32 = arith.constant 7 : i32
    %25 = vector.broadcast %c7_i32 : i32 to vector<64x1xi32>
    %26 = arith.andi %22, %25 : vector<64x1xi32>
    %27 = tpu.iota {dimensions = array<i32: 0>} : vector<8x1xi32>
    %c0_i32 = arith.constant 0 : i32
    %c7_i32_7 = arith.constant 7 : i32
    %28 = vector.broadcast %c0_i32 : i32 to vector<1x256xi32>
    %29 = arith.maxsi %28, %20 : vector<1x256xi32>
    %30 = vector.broadcast %c7_i32_7 : i32 to vector<1x256xi32>
    %31 = arith.minsi %30, %29 : vector<1x256xi32>
    %c1_i32 = arith.constant 1 : i32
    %32 = vector.broadcast %c1_i32 : i32 to vector<1x256xi32>
    %33 = arith.addi %20, %32 : vector<1x256xi32>
    %c0_i32_8 = arith.constant 0 : i32
    %c7_i32_9 = arith.constant 7 : i32
    %34 = vector.broadcast %c0_i32_8 : i32 to vector<1x256xi32>
    %35 = arith.maxsi %34, %33 : vector<1x256xi32>
    %36 = vector.broadcast %c7_i32_9 : i32 to vector<1x256xi32>
    %37 = arith.minsi %36, %35 : vector<1x256xi32>
    %38 = vector.broadcast %24 : vector<64x1xi32> to vector<64x256xi32>
    %39 = vector.broadcast %31 : vector<1x256xi32> to vector<64x256xi32>
    %40 = arith.cmpi eq, %38, %39 : vector<64x256xi32>
    %cst_10 = arith.constant 1.000000e+00 : f32
    %41 = vector.broadcast %cst_10 : f32 to vector<1x256xf32>
    %42 = arith.subf %41, %17 : vector<1x256xf32>
    %cst_11 = arith.constant 0.000000e+00 : f32
    %43 = vector.shape_cast %42 : vector<1x256xf32> to vector<1x256xf32>
    %44 = vector.broadcast %43 : vector<1x256xf32> to vector<64x256xf32>
    %45 = vector.broadcast %cst_11 : f32 to vector<64x256xf32>
    %46 = arith.select %40, %44, %45 : vector<64x256xi1>, vector<64x256xf32>
    %47 = vector.broadcast %24 : vector<64x1xi32> to vector<64x256xi32>
    %48 = vector.broadcast %37 : vector<1x256xi32> to vector<64x256xi32>
    %49 = arith.cmpi eq, %47, %48 : vector<64x256xi32>
    %cst_12 = arith.constant 0.000000e+00 : f32
    %50 = vector.shape_cast %17 : vector<1x256xf32> to vector<1x256xf32>
    %51 = vector.broadcast %50 : vector<1x256xf32> to vector<64x256xf32>
    %52 = vector.broadcast %cst_12 : f32 to vector<64x256xf32>
    %53 = arith.select %49, %51, %52 : vector<64x256xi1>, vector<64x256xf32>
    %54 = arith.addf %46, %53 : vector<64x256xf32>
    %c0_i32_13 = arith.constant 0 : i32
    %c7_i32_14 = arith.constant 7 : i32
    %55 = vector.broadcast %c0_i32_13 : i32 to vector<1x256xi32>
    %56 = arith.maxsi %55, %21 : vector<1x256xi32>
    %57 = vector.broadcast %c7_i32_14 : i32 to vector<1x256xi32>
    %58 = arith.minsi %57, %56 : vector<1x256xi32>
    %c1_i32_15 = arith.constant 1 : i32
    %59 = vector.broadcast %c1_i32_15 : i32 to vector<1x256xi32>
    %60 = arith.addi %21, %59 : vector<1x256xi32>
    %c0_i32_16 = arith.constant 0 : i32
    %c7_i32_17 = arith.constant 7 : i32
    %61 = vector.broadcast %c0_i32_16 : i32 to vector<1x256xi32>
    %62 = arith.maxsi %61, %60 : vector<1x256xi32>
    %63 = vector.broadcast %c7_i32_17 : i32 to vector<1x256xi32>
    %64 = arith.minsi %63, %62 : vector<1x256xi32>
    %65 = vector.broadcast %26 : vector<64x1xi32> to vector<64x256xi32>
    %66 = vector.broadcast %58 : vector<1x256xi32> to vector<64x256xi32>
    %67 = arith.cmpi eq, %65, %66 : vector<64x256xi32>
    %cst_18 = arith.constant 1.000000e+00 : f32
    %68 = vector.broadcast %cst_18 : f32 to vector<1x256xf32>
    %69 = arith.subf %68, %18 : vector<1x256xf32>
    %cst_19 = arith.constant 0.000000e+00 : f32
    %70 = vector.shape_cast %69 : vector<1x256xf32> to vector<1x256xf32>
    %71 = vector.broadcast %70 : vector<1x256xf32> to vector<64x256xf32>
    %72 = vector.broadcast %cst_19 : f32 to vector<64x256xf32>
    %73 = arith.select %67, %71, %72 : vector<64x256xi1>, vector<64x256xf32>
    %74 = vector.broadcast %26 : vector<64x1xi32> to vector<64x256xi32>
    %75 = vector.broadcast %64 : vector<1x256xi32> to vector<64x256xi32>
    %76 = arith.cmpi eq, %74, %75 : vector<64x256xi32>
    %cst_20 = arith.constant 0.000000e+00 : f32
    %77 = vector.shape_cast %18 : vector<1x256xf32> to vector<1x256xf32>
    %78 = vector.broadcast %77 : vector<1x256xf32> to vector<64x256xf32>
    %79 = vector.broadcast %cst_20 : f32 to vector<64x256xf32>
    %80 = arith.select %76, %78, %79 : vector<64x256xi1>, vector<64x256xf32>
    %81 = arith.addf %73, %80 : vector<64x256xf32>
    %82 = arith.mulf %54, %81 : vector<64x256xf32>
    %c0_i32_21 = arith.constant 0 : i32
    %c7_i32_22 = arith.constant 7 : i32
    %83 = vector.broadcast %c0_i32_21 : i32 to vector<1x256xi32>
    %84 = arith.maxsi %83, %19 : vector<1x256xi32>
    %85 = vector.broadcast %c7_i32_22 : i32 to vector<1x256xi32>
    %86 = arith.minsi %85, %84 : vector<1x256xi32>
    %c1_i32_23 = arith.constant 1 : i32
    %87 = vector.broadcast %c1_i32_23 : i32 to vector<1x256xi32>
    %88 = arith.addi %19, %87 : vector<1x256xi32>
    %c0_i32_24 = arith.constant 0 : i32
    %c7_i32_25 = arith.constant 7 : i32
    %89 = vector.broadcast %c0_i32_24 : i32 to vector<1x256xi32>
    %90 = arith.maxsi %89, %88 : vector<1x256xi32>
    %91 = vector.broadcast %c7_i32_25 : i32 to vector<1x256xi32>
    %92 = arith.minsi %91, %90 : vector<1x256xi32>
    %93 = vector.broadcast %27 : vector<8x1xi32> to vector<8x256xi32>
    %94 = vector.broadcast %86 : vector<1x256xi32> to vector<8x256xi32>
    %95 = arith.cmpi eq, %93, %94 : vector<8x256xi32>
    %cst_26 = arith.constant 1.000000e+00 : f32
    %96 = vector.broadcast %cst_26 : f32 to vector<1x256xf32>
    %97 = arith.subf %96, %16 : vector<1x256xf32>
    %cst_27 = arith.constant 0.000000e+00 : f32
    %98 = vector.shape_cast %97 : vector<1x256xf32> to vector<1x256xf32>
    %99 = vector.broadcast %98 : vector<1x256xf32> to vector<8x256xf32>
    %100 = vector.broadcast %cst_27 : f32 to vector<8x256xf32>
    %101 = arith.select %95, %99, %100 : vector<8x256xi1>, vector<8x256xf32>
    %102 = vector.broadcast %27 : vector<8x1xi32> to vector<8x256xi32>
    %103 = vector.broadcast %92 : vector<1x256xi32> to vector<8x256xi32>
    %104 = arith.cmpi eq, %102, %103 : vector<8x256xi32>
    %cst_28 = arith.constant 0.000000e+00 : f32
    %105 = vector.shape_cast %16 : vector<1x256xf32> to vector<1x256xf32>
    %106 = vector.broadcast %105 : vector<1x256xf32> to vector<8x256xf32>
    %107 = vector.broadcast %cst_28 : f32 to vector<8x256xf32>
    %108 = arith.select %104, %106, %107 : vector<8x256xi1>, vector<8x256xf32>
    %109 = arith.addf %101, %108 : vector<8x256xf32>
    %cst_29 = arith.constant dense<0.000000e+00> : vector<24x256xf32>
    %110 = tpu.matmul %3, %82, %cst_29 {dimension_numbers = #tpu.dot_dimension_numbers<[1], [0], [0], [1], [0, 0, 1, 1], [], []>, precision = #tpu.contract_precision<fp32>} : vector<24x64xf32>, vector<64x256xf32>, vector<24x256xf32> -> vector<24x256xf32>
    %111 = vector.extract_strided_slice %110 {offsets = [0, 0], sizes = [8, 256], strides = [1, 1]} : vector<24x256xf32> to vector<8x256xf32>
    %112 = arith.mulf %111, %109 : vector<8x256xf32>
    %cst_30 = arith.constant dense<0.000000e+00> : vector<256xf32>
    %113 = vector.multi_reduction <add>, %112, %cst_30 [0] : vector<8x256xf32> to vector<256xf32>
    %114 = vector.shape_cast %113 : vector<256xf32> to vector<1x256xf32>
    %115 = vector.extract_strided_slice %110 {offsets = [8, 0], sizes = [8, 256], strides = [1, 1]} : vector<24x256xf32> to vector<8x256xf32>
    %116 = arith.mulf %115, %109 : vector<8x256xf32>
    %cst_31 = arith.constant dense<0.000000e+00> : vector<256xf32>
    %117 = vector.multi_reduction <add>, %116, %cst_31 [0] : vector<8x256xf32> to vector<256xf32>
    %118 = vector.shape_cast %117 : vector<256xf32> to vector<1x256xf32>
    %119 = vector.extract_strided_slice %110 {offsets = [16, 0], sizes = [8, 256], strides = [1, 1]} : vector<24x256xf32> to vector<8x256xf32>
    %120 = arith.mulf %119, %109 : vector<8x256xf32>
    %cst_32 = arith.constant dense<0.000000e+00> : vector<256xf32>
    %121 = vector.multi_reduction <add>, %120, %cst_32 [0] : vector<8x256xf32> to vector<256xf32>
    %122 = vector.shape_cast %121 : vector<256xf32> to vector<1x256xf32>
    %123 = tpu.concatenate %114, %118, %122 in 0 : vector<1x256xf32>, vector<1x256xf32>, vector<1x256xf32> -> vector<3x256xf32>
    %c0_33 = arith.constant 0 : index
    %c0_34 = arith.constant 0 : index
    %c0_35 = arith.constant 0 : index
    %124 = vector.load %arg4[%c0_33, %c0_34, %c0_35] : memref<1x3x256xf32, #tpu.memory_space<vmem>>, vector<1x3x256xf32>
    %125 = vector.shape_cast %124 : vector<1x3x256xf32> to vector<3x256xf32>
    %126 = vector.shape_cast %123 : vector<3x256xf32> to vector<1x3x256xf32>
    tpu.vector_store %arg4[%c0_33, %c0_34, %c0_35], %126 {strides = array<i32>} : memref<1x3x256xf32, #tpu.memory_space<vmem>>, vector<1x3x256xf32>,
    return
  }
  func.func @transform_0(%arg0: i32, %arg1: i32) -> (i32, i32, i32) {
    %c0_i32 = arith.constant 0 : i32
    %c0_i32_0 = arith.constant 0 : i32
    return %arg0, %c0_i32, %arg1 : i32, i32, i32
  }
  func.func @transform_1(%arg0: i32, %arg1: i32) -> (i32, i32, i32) {
    %c0_i32 = arith.constant 0 : i32
    %c0_i32_0 = arith.constant 0 : i32
    %c0_i32_1 = arith.constant 0 : i32
    return %arg0, %c0_i32, %c0_i32_0 : i32, i32, i32
  }
  func.func @transform_2(%arg0: i32, %arg1: i32) -> (i32, i32, i32) {
    %c0_i32 = arith.constant 0 : i32
    %c0_i32_0 = arith.constant 0 : i32
    return %arg0, %c0_i32, %arg1 : i32, i32, i32
  }
}

</mosaic_0001>

<llo_original>
// kernel: tpu_custom_call.1
$region0: #{tpu_custom_call.1}
  #allocation0 [shape = 'u32[]', space=smem, size = 0x4, offset = 0x4, fixed_abs, tag = 'smem constant byte address 0x4 - core index']
  #allocation1 [shape = 'u32[144,128]{1,0:T(1,128)}', space=vmem, size = 0x12000, scoped, tag = 'internal scratch']
  %s0 = inlined_call_operand.vmem [shape: f32[2,3,256], index: 0, kind: input, shape index: {}]
  %s1 = inlined_call_operand.hbm [shape: f32[2,24,64], index: 1, kind: input, shape index: {}]
  %s2 = inlined_call_operand.vmem [shape: f32[2,3,256], index: 2, kind: output, shape index: {}]
  %s3 = sld [smem:[#allocation0]]
  $region45: #{tpu_custom_call.1} parent=0
    _
  %s5 = ssub.s32 1, %s3
  %s6 = scalar_select 0, %s5, %s3
  $region1: #{tpu_custom_call.1} parent=0
    #allocation2 [shape = 'u8[24576]{0}', space=vmem, size = 0x6000, scoped, tag = 'input window, operand 1']
    #allocation3 [shape = 's32[2]{0}', space=sflag, size = 0x8, scoped, tag = 'scoped memory for tpu_custom_call.1']
    %7 = vsyncpa [#allocation3], 0
    %s8 = scalar_lea.sflag [#allocation3], 1
    %9 = vsyncpa %s8, 0
    loop: start=0, step=1, limit=4
    $region2: #{tpu_custom_call.1} parent=1 // loop_pre_header
      _
    $region3: #{tpu_custom_call.1} parent=1 // loop_header
      %s11 = sphi 0, %s15
      %p12 = scmp.ge.s32.totalorder %s11, 4
      %s18 = sphi 0, %s30
      %s19 = sphi 0, %s26
      %s20 = sphi 0, %s18
      %s21 = sphi 0, %s19
      %s22 = sphi 0, %s20
      %s23 = sphi 0, %s21
      %s35 = sphi 0, %s37
      %s38 = sphi 0, %s35
      %s39 = sphi 0, %s38
      %s55 = sphi 0, %s39
      %s61 = sphi 0, %s63
      %s64 = sphi 0, %s61
      %s65 = sphi 0, %s64
      %s81 = sphi 0, %s65
      %s89 = sphi 0, %s91
      %s92 = sphi 0, %s89
      %s93 = sphi 0, %s92
      %s109 = sphi 0, %s93
    $region4: #{tpu_custom_call.1} parent=1 // loop_header_branch
      %14 = sbr.rel (%p12) target = $region8
    $region5: #{tpu_custom_call.1} parent=1 // loop_body
      %s16 = ssub.s32 %s11, 1
      %s17 = ssub.s32 %s11, 2
      %s24 = sadd.s32 1, %s19
      %p25 = scmp.ge.s32.totalorder %s24, 1
      %s26 = scalar_select %p25, 0, %s24
      %s27 = sadd.s32 1, %s18
      %s28 = scalar_select %p25, %s27, %s18
      %p29 = scmp.ge.s32.totalorder %s28, 2
      %s30 = scalar_select %p29, 0, %s28
      %s31 = ssub.s32 %s18, %s30
      %s32 = ssub.s32 %s19, %s26
      %s33 = sor.u32 %s31, %s32
      %p34 = scmp.eq.s32.totalorder %s33, 0
      %s36 = sadd.s32 %s35, 1
      %s37 = scalar_select %p34, %s35, %s36
      %p40 = pneg %p34
      %p41 = scmp.eq.s32.totalorder %s11, 1
      %p42 = por %p40, %p41
      %p43 = scmp.ne.s32.totalorder %s35, %s38
      %p44 = scmp.eq.s32.totalorder %s11, 0
      %p45 = por %p43, %p44
      %p46 = scmp.ne.s32.totalorder %s35, %s38
      %p47 = scmp.eq.s32.totalorder %s16, 1
      %p48 = por %p46, %p47
      %p49 = scmp.ne.s32.totalorder %s38, %s39
      %p50 = scmp.eq.s32.totalorder %s16, 0
      %p51 = por %p49, %p50
      %p52 = scmp.ne.s32.totalorder %s38, %s39
      %p53 = scmp.eq.s32.totalorder %s17, 1
      %p54 = por %p52, %p53
      %p56 = scmp.ne.s32.totalorder %s39, %s55
      %p57 = scmp.eq.s32.totalorder %s17, 0
      %p58 = por %p56, %p57
      %s59 = ssub.s32 %s18, %s30
      %p60 = scmp.eq.s32.totalorder %s59, 0
      %s62 = sadd.s32 %s61, 1
      %s63 = scalar_select %p60, %s61, %s62
      %p66 = pneg %p60
      %p67 = scmp.eq.s32.totalorder %s11, 1
      %p68 = por %p66, %p67
      %p69 = scmp.ne.s32.totalorder %s61, %s64
      %p70 = scmp.eq.s32.totalorder %s11, 0
      %p71 = por %p69, %p70
      %p72 = scmp.ne.s32.totalorder %s61, %s64
      %p73 = scmp.eq.s32.totalorder %s16, 1
      %p74 = por %p72, %p73
      %p75 = scmp.ne.s32.totalorder %s64, %s65
      %p76 = scmp.eq.s32.totalorder %s16, 0
      %p77 = por %p75, %p76
      %p78 = scmp.ne.s32.totalorder %s64, %s65
      %p79 = scmp.eq.s32.totalorder %s17, 1
      %p80 = por %p78, %p79
      %p82 = scmp.ne.s32.totalorder %s65, %s81
      %p83 = scmp.eq.s32.totalorder %s17, 0
      %p84 = por %p82, %p83
      %s85 = ssub.s32 %s18, %s30
      %s86 = ssub.s32 %s19, %s26
      %s87 = sor.u32 %s85, %s86
      %p88 = scmp.eq.s32.totalorder %s87, 0
      %s90 = sadd.s32 %s89, 1
      %s91 = scalar_select %p88, %s89, %s90
      %p94 = pneg %p88
      %p95 = scmp.eq.s32.totalorder %s11, 1
      %p96 = por %p94, %p95
      %p97 = scmp.ne.s32.totalorder %s89, %s92
      %p98 = scmp.eq.s32.totalorder %s11, 0
      %p99 = por %p97, %p98
      %p100 = scmp.ne.s32.totalorder %s89, %s92
      %p101 = scmp.eq.s32.totalorder %s16, 1
      %p102 = por %p100, %p101
      %p103 = scmp.ne.s32.totalorder %s92, %s93
      %p104 = scmp.eq.s32.totalorder %s16, 0
      %p105 = por %p103, %p104
      %p106 = scmp.ne.s32.totalorder %s92, %s93
      %p107 = scmp.eq.s32.totalorder %s17, 1
      %p108 = por %p106, %p107
      %p110 = scmp.ne.s32.totalorder %s93, %s109
      %p111 = scmp.eq.s32.totalorder %s17, 0
      %p112 = por %p110, %p111
      %p113 = scmp.le.s32.totalorder 1, %s11
      %p114 = scmp.lt.s32.totalorder %s11, 3
      %p115 = pnand %p113, %p114
      %p116 = pneg %p115
      // Predicated region
      $region9: #{tpu_custom_call.1} parent=5 // pred_check
        _
      $region10: #{tpu_custom_call.1} parent=5 // pred_check_branch
        %118 = sbr.rel (%p115) target = $region12
      $region11: #{tpu_custom_call.1} parent=5 // pred_region
        %s119 = ssub.s32 %s11, 1
      $region12: #{tpu_custom_call.1} parent=5 // pred_fallthru
        _
      %p120 = scmp.lt.s32.totalorder %s11, 2
      // Predicated region
      $region13: #{tpu_custom_call.1} parent=5 // pred_check
        %p121 = pneg %p120
      $region14: #{tpu_custom_call.1} parent=5 // pred_check_branch
        %123 = sbr.rel (%p121) target = $region16
      $region15: #{tpu_custom_call.1} parent=5 // pred_region
        // Predicated region
        $region17: #{tpu_custom_call.1} parent=15 // pred_check
          %p124 = pneg %p45
        $region18: #{tpu_custom_call.1} parent=15 // pred_check_branch
          %126 = sbr.rel (%p124) target = $region20
        $region19: #{tpu_custom_call.1} parent=15 // pred_region
          %s127 = smul.u32 2, %s19
          %p128 = scmp.lt.s32.totalorder %s18, 1
          %s129 = scalar_select %p128, %s18, 1
          %p130 = scmp.lt.s32.totalorder %s127, 1
          %s131 = scalar_select %p130, %s127, 1
          %s132 = smul.addr %s129, 2
          %s133 = sadd.s32 %s131, %s132
          %s134 = smul.addr %s133, 4
          %s135 = scalar_lea.vmem %s0, %s134
          %s136 = smul.u32 2, %s19
        $region20: #{tpu_custom_call.1} parent=15 // pred_fallthru
          _
        // Predicated region
        $region21: #{tpu_custom_call.1} parent=15 // pred_check
          %p137 = pneg %p71
        $region22: #{tpu_custom_call.1} parent=15 // pred_check_branch
          %139 = sbr.rel (%p137) target = $region24
        $region23: #{tpu_custom_call.1} parent=15 // pred_region
          %s140 = sand.u32 %s61, 1
          %s141 = scalar_lea.sflag [#allocation3], %s140
          %s142 = sand.u32 %s61, 1
          %s143 = smul.addr %s142, 24
          %s144 = scalar_lea.vmem [#allocation2], %s143
          %s146 = ssub.s32 384, 384
          %147 = vsyncadd %s141, %s146
          %s148 = smul.addr %s18, 3
          %s149 = smul.addr %s148, 128
          %s150 = scalar_lea.hbm %s1, %s149
          %s151 = sshll.u32 %s144, 4
          %s152 = int_to_ptr.vmem [resolvable:$true] %s151
          %157 = dma.hbm_to_vmem [thread:$0]  %s150, 384, %s152, %s141, 128, 128, 8
        $region24: #{tpu_custom_call.1} parent=15 // pred_fallthru
          _
      $region16: #{tpu_custom_call.1} parent=5 // pred_fallthru
        _
      %p158 = scmp.le.s32.totalorder 1, %s11
      %p159 = scmp.lt.s32.totalorder %s11, 3
      %p160 = pnand %p158, %p159
      %p161 = pneg %p160
      // Predicated region
      $region25: #{tpu_custom_call.1} parent=5 // pred_check
        _
      $region26: #{tpu_custom_call.1} parent=5 // pred_check_branch
        %163 = sbr.rel (%p160) target = $region28
      $region27: #{tpu_custom_call.1} parent=5 // pred_region
        %s164 = ssub.s32 %s11, 1
        %s165 = sand.u32 %s64, 1
        %s166 = scalar_lea.sflag [#allocation3], %s165
        %s167 = sand.u32 %s64, 1
        %s168 = smul.addr %s167, 24
        %s169 = scalar_lea.vmem [#allocation2], %s168
        // Predicated region
        $region29: #{tpu_custom_call.1} parent=27 // pred_check
          %p170 = pneg %p77
        $region30: #{tpu_custom_call.1} parent=27 // pred_check_branch
          %172 = sbr.rel (%p170) target = $region32
        $region31: #{tpu_custom_call.1} parent=27 // pred_region
          %173 = dma.done %s166, 384
        $region32: #{tpu_custom_call.1} parent=27 // pred_fallthru
          _
        %s174 = smul.u32 2, %s21
        %p175 = scmp.lt.s32.totalorder %s20, 1
        %s176 = scalar_select %p175, %s20, 1
        %p177 = scmp.lt.s32.totalorder %s174, 1
        %s178 = scalar_select %p177, %s174, 1
        %s179 = smul.addr %s176, 2
        %s180 = sadd.s32 %s178, %s179
        %s181 = smul.addr %s180, 4
        %s182 = scalar_lea.vmem %s0, %s181
        %p183 = pneg %p51
        %p184 = pneg %p48
        %s185 = sand.u32 %s64, 1
        %s186 = scalar_lea.sflag [#allocation3], %s185
        %s187 = sand.u32 %s64, 1
        %s188 = smul.addr %s187, 24
        %s189 = scalar_lea.vmem [#allocation2], %s188
        %p190 = pneg %p77
        %p191 = pneg %p74
        %p192 = pneg %p105
        %p193 = pneg %p102
        %s194 = smul.u32 2, %s21
        %p195 = scmp.lt.s32.totalorder %s20, 1
        %s196 = scalar_select %p195, %s20, 1
        %p197 = scmp.lt.s32.totalorder %s194, 1
        %s198 = scalar_select %p197, %s194, 1
        %s199 = smul.addr %s196, 2
        %s200 = sadd.s32 %s198, %s199
        %s201 = smul.addr %s200, 4
        %s202 = scalar_lea.vmem %s2, %s201
        %s203 = smul.u32 2, %s21
        %p204 = scmp.lt.s32.totalorder %s20, 1
        %s205 = scalar_select %p204, %s20, 1
        %p206 = scmp.lt.s32.totalorder %s203, 1
        %s207 = scalar_select %p206, %s203, 1
        %s208 = smul.addr %s205, 2
        %s209 = sadd.s32 %s207, %s208
        %s210 = smul.addr %s209, 4
        %s211 = scalar_lea.vmem %s0, %s210
        %s212 = smul.u32 2, %s21
        %s213 = smul.u32 2, %s21
        %p214 = scmp.lt.s32.totalorder %s20, 1
        %s215 = scalar_select %p214, %s20, 1
        %p216 = scmp.lt.s32.totalorder %s213, 1
        %s217 = scalar_select %p216, %s213, 1
        %s218 = smul.addr %s215, 2
        %s219 = sadd.s32 %s217, %s218
        %s220 = smul.addr %s219, 4
        %s221 = scalar_lea.vmem %s2, %s220
        %s222 = smul.u32 2, %s21
        %v223 = vld [vmem:[%s211] sm:$0x77]
        %v224 = vld [vmem:[%s169] sm:$0xff]
        %v225 = vld [vmem:[%s169 + $0x8] sm:$0xff]
        %v226 = vld [vmem:[%s169 + $0x10] sm:$0xff]
        %v227 = vmul.f32 %v223, 7.0
        %v228 = vfloor.f32 %v227
        %v229 = vsub.f32 %v227, %v228
        %v230 = vcvt.f32.s32.to.zero.pseudo %v228
        %v231 = vlaneseq
        %v232 = vshrl.u32 %v231, 7
        %v233 = vadd.s32 %v232, 8
        %v234 = vadd.s32 %v232, 16
        %v235 = vadd.s32 %v232, 24
        %v236 = vadd.s32 %v232, 32
        %v237 = vadd.s32 %v232, 40
        %v238 = vadd.s32 %v232, 48
        %v239 = vadd.s32 %v232, 56
        %v240 = vshra.s32 %v232, 3
        %v241 = vshra.s32 %v233, 3
        %v242 = vshra.s32 %v234, 3
        %v243 = vshra.s32 %v235, 3
        %v244 = vshra.s32 %v236, 3
        %v245 = vshra.s32 %v237, 3
        %v246 = vshra.s32 %v238, 3
        %v247 = vshra.s32 %v239, 3
        %v248 = vand.u32 %v232, 7
        %v249 = vand.u32 %v233, 7
        %v250 = vand.u32 %v234, 7
        %v251 = vand.u32 %v235, 7
        %v252 = vand.u32 %v236, 7
        %v253 = vand.u32 %v237, 7
        %v254 = vand.u32 %v238, 7
        %v255 = vand.u32 %v239, 7
        %vm256 = vcmp.gt.s32.totalorder %v230, 0
        %v257 = vsel %vm256, %v230, 0
        %vm258 = vcmp.lt.s32.totalorder %v257, 7
        %v259 = vsel %vm258, %v257, 7
        %v260 = vadd.s32 %v230, 1
        %vm261 = vcmp.gt.s32.totalorder %v260, 0
        %v262 = vsel %vm261, %v260, 0
        %vm263 = vcmp.lt.s32.totalorder %v262, 7
        %v264 = vsel %vm263, %v262, 7
        %v265 = vlaneseq
        %v266 = vshrl.u32 %v265, 7
        %v267 = vsub.s32 1, %v266
        %v268 = vrot.slane %v259, %v267
        %v269 = vlaneseq
        %v270 = vshrl.u32 %v269, 7
        %v271 = vsub.s32 5, %v270
        %v272 = vrot.slane %v259, %v271
        %v273 = vlaneseq
        %v274 = vshrl.u32 %v273, 7
        %v275 = vsub.s32 1, %v274
        %v276 = vrot.slane %v268, %v275
        %v277 = vlaneseq
        %v278 = vshrl.u32 %v277, 7
        %v279 = vsub.s32 1, %v278
        %v280 = vrot.slane %v272, %v279
        %vm281 = vcmp.eq.s32.totalorder %v240, %v276
        %vm282 = vcmp.eq.s32.totalorder %v240, %v280
        %vm283 = vcmp.eq.s32.totalorder %v241, %v276
        %vm284 = vcmp.eq.s32.totalorder %v241, %v280
        %vm285 = vcmp.eq.s32.totalorder %v242, %v276
        %vm286 = vcmp.eq.s32.totalorder %v242, %v280
        %vm287 = vcmp.eq.s32.totalorder %v243, %v276
        %vm288 = vcmp.eq.s32.totalorder %v243, %v280
        %vm289 = vcmp.eq.s32.totalorder %v244, %v276
        %vm290 = vcmp.eq.s32.totalorder %v244, %v280
        %vm291 = vcmp.eq.s32.totalorder %v245, %v276
        %vm292 = vcmp.eq.s32.totalorder %v245, %v280
        %vm293 = vcmp.eq.s32.totalorder %v246, %v276
        %vm294 = vcmp.eq.s32.totalorder %v246, %v280
        %vm295 = vcmp.eq.s32.totalorder %v247, %v276
        %vm296 = vcmp.eq.s32.totalorder %v247, %v280
        %v297 = vsub.f32 1.0, %v229
        %v299 = vlaneseq
        %v300 = vshrl.u32 %v299, 7
        %v301 = vsub.s32 1, %v300
        %v302 = vrot.slane %v297, %v301
        %v303 = vlaneseq
        %v304 = vshrl.u32 %v303, 7
        %v305 = vsub.s32 5, %v304
        %v306 = vrot.slane %v297, %v305
        %v309 = vlaneseq
        %v310 = vshrl.u32 %v309, 7
        %v311 = vsub.s32 1, %v310
        %v312 = vrot.slane %v302, %v311
        %v313 = vlaneseq
        %v314 = vshrl.u32 %v313, 7
        %v315 = vsub.s32 1, %v314
        %v316 = vrot.slane %v306, %v315
        %v317 = vsel %vm281, %v312, 0.0
        %v318 = vsel %vm282, %v316, 0.0
        %v319 = vsel %vm283, %v312, 0.0
        %v320 = vsel %vm284, %v316, 0.0
        %v321 = vsel %vm285, %v312, 0.0
        %v322 = vsel %vm286, %v316, 0.0
        %v323 = vsel %vm287, %v312, 0.0
        %v324 = vsel %vm288, %v316, 0.0
        %v325 = vsel %vm289, %v312, 0.0
        %v326 = vsel %vm290, %v316, 0.0
        %v327 = vsel %vm291, %v312, 0.0
        %v328 = vsel %vm292, %v316, 0.0
        %v329 = vsel %vm293, %v312, 0.0
        %v330 = vsel %vm294, %v316, 0.0
        %v331 = vsel %vm295, %v312, 0.0
        %v332 = vsel %vm296, %v316, 0.0
        %v333 = vlaneseq
        %v334 = vshrl.u32 %v333, 7
        %v335 = vsub.s32 1, %v334
        %v336 = vrot.slane %v264, %v335
        %v337 = vlaneseq
        %v338 = vshrl.u32 %v337, 7
        %v339 = vsub.s32 5, %v338
        %v340 = vrot.slane %v264, %v339
        %v341 = vlaneseq
        %v342 = vshrl.u32 %v341, 7
        %v343 = vsub.s32 1, %v342
        %v344 = vrot.slane %v336, %v343
        %v345 = vlaneseq
        %v346 = vshrl.u32 %v345, 7
        %v347 = vsub.s32 1, %v346
        %v348 = vrot.slane %v340, %v347
        %vm349 = vcmp.eq.s32.totalorder %v240, %v344
        %vm350 = vcmp.eq.s32.totalorder %v240, %v348
        %vm351 = vcmp.eq.s32.totalorder %v241, %v344
        %vm352 = vcmp.eq.s32.totalorder %v241, %v348
        %vm353 = vcmp.eq.s32.totalorder %v242, %v344
        %vm354 = vcmp.eq.s32.totalorder %v242, %v348
        %vm355 = vcmp.eq.s32.totalorder %v243, %v344
        %vm356 = vcmp.eq.s32.totalorder %v243, %v348
        %vm357 = vcmp.eq.s32.totalorder %v244, %v344
        %vm358 = vcmp.eq.s32.totalorder %v244, %v348
        %vm359 = vcmp.eq.s32.totalorder %v245, %v344
        %vm360 = vcmp.eq.s32.totalorder %v245, %v348
        %vm361 = vcmp.eq.s32.totalorder %v246, %v344
        %vm362 = vcmp.eq.s32.totalorder %v246, %v348
        %vm363 = vcmp.eq.s32.totalorder %v247, %v344
        %vm364 = vcmp.eq.s32.totalorder %v247, %v348
        %v366 = vlaneseq
        %v367 = vshrl.u32 %v366, 7
        %v368 = vsub.s32 1, %v367
        %v369 = vrot.slane %v229, %v368
        %v370 = vlaneseq
        %v371 = vshrl.u32 %v370, 7
        %v372 = vsub.s32 5, %v371
        %v373 = vrot.slane %v229, %v372
        %v376 = vlaneseq
        %v377 = vshrl.u32 %v376, 7
        %v378 = vsub.s32 1, %v377
        %v379 = vrot.slane %v369, %v378
        %v380 = vlaneseq
        %v381 = vshrl.u32 %v380, 7
        %v382 = vsub.s32 1, %v381
        %v383 = vrot.slane %v373, %v382
        %v384 = vsel %vm349, %v379, 0.0
        %v385 = vsel %vm350, %v383, 0.0
        %v386 = vsel %vm351, %v379, 0.0
        %v387 = vsel %vm352, %v383, 0.0
        %v388 = vsel %vm353, %v379, 0.0
        %v389 = vsel %vm354, %v383, 0.0
        %v390 = vsel %vm355, %v379, 0.0
        %v391 = vsel %vm356, %v383, 0.0
        %v392 = vsel %vm357, %v379, 0.0
        %v393 = vsel %vm358, %v383, 0.0
        %v394 = vsel %vm359, %v379, 0.0
        %v395 = vsel %vm360, %v383, 0.0
        %v396 = vsel %vm361, %v379, 0.0
        %v397 = vsel %vm362, %v383, 0.0
        %v398 = vsel %vm363, %v379, 0.0
        %v399 = vsel %vm364, %v383, 0.0
        %v400 = vadd.f32 %v317, %v384
        %v401 = vadd.f32 %v318, %v385
        %v402 = vadd.f32 %v319, %v386
        %v403 = vadd.f32 %v320, %v387
        %v404 = vadd.f32 %v321, %v388
        %v405 = vadd.f32 %v322, %v389
        %v406 = vadd.f32 %v323, %v390
        %v407 = vadd.f32 %v324, %v391
        %v408 = vadd.f32 %v325, %v392
        %v409 = vadd.f32 %v326, %v393
        %v410 = vadd.f32 %v327, %v394
        %v411 = vadd.f32 %v328, %v395
        %v412 = vadd.f32 %v329, %v396
        %v413 = vadd.f32 %v330, %v397
        %v414 = vadd.f32 %v331, %v398
        %v415 = vadd.f32 %v332, %v399
        %v416 = vlaneseq
        %v417 = vshrl.u32 %v416, 7
        %v418 = vsub.s32 2, %v417
        %v419 = vrot.slane %v259, %v418
        %v420 = vlaneseq
        %v421 = vshrl.u32 %v420, 7
        %v422 = vsub.s32 6, %v421
        %v423 = vrot.slane %v259, %v422
        %v424 = vlaneseq
        %v425 = vshrl.u32 %v424, 7
        %v426 = vsub.s32 2, %v425
        %v427 = vrot.slane %v419, %v426
        %v428 = vlaneseq
        %v429 = vshrl.u32 %v428, 7
        %v430 = vsub.s32 2, %v429
        %v431 = vrot.slane %v423, %v430
        %vm432 = vcmp.eq.s32.totalorder %v248, %v427
        %vm433 = vcmp.eq.s32.totalorder %v248, %v431
        %vm434 = vcmp.eq.s32.totalorder %v249, %v427
        %vm435 = vcmp.eq.s32.totalorder %v249, %v431
        %vm436 = vcmp.eq.s32.totalorder %v250, %v427
        %vm437 = vcmp.eq.s32.totalorder %v250, %v431
        %vm438 = vcmp.eq.s32.totalorder %v251, %v427
        %vm439 = vcmp.eq.s32.totalorder %v251, %v431
        %vm440 = vcmp.eq.s32.totalorder %v252, %v427
        %vm441 = vcmp.eq.s32.totalorder %v252, %v431
        %vm442 = vcmp.eq.s32.totalorder %v253, %v427
        %vm443 = vcmp.eq.s32.totalorder %v253, %v431
        %vm444 = vcmp.eq.s32.totalorder %v254, %v427
        %vm445 = vcmp.eq.s32.totalorder %v254, %v431
        %vm446 = vcmp.eq.s32.totalorder %v255, %v427
        %vm447 = vcmp.eq.s32.totalorder %v255, %v431
        %v448 = vlaneseq
        %v449 = vshrl.u32 %v448, 7
        %v450 = vsub.s32 2, %v449
        %v451 = vrot.slane %v297, %v450
        %v452 = vlaneseq
        %v453 = vshrl.u32 %v452, 7
        %v454 = vsub.s32 6, %v453
        %v455 = vrot.slane %v297, %v454
        %v458 = vlaneseq
        %v459 = vshrl.u32 %v458, 7
        %v460 = vsub.s32 2, %v459
        %v461 = vrot.slane %v451, %v460
        %v462 = vlaneseq
        %v463 = vshrl.u32 %v462, 7
        %v464 = vsub.s32 2, %v463
        %v465 = vrot.slane %v455, %v464
        %v466 = vsel %vm432, %v461, 0.0
        %v467 = vsel %vm433, %v465, 0.0
        %v468 = vsel %vm434, %v461, 0.0
        %v469 = vsel %vm435, %v465, 0.0
        %v470 = vsel %vm436, %v461, 0.0
        %v471 = vsel %vm437, %v465, 0.0
        %v472 = vsel %vm438, %v461, 0.0
        %v473 = vsel %vm439, %v465, 0.0
        %v474 = vsel %vm440, %v461, 0.0
        %v475 = vsel %vm441, %v465, 0.0
        %v476 = vsel %vm442, %v461, 0.0
        %v477 = vsel %vm443, %v465, 0.0
        %v478 = vsel %vm444, %v461, 0.0
        %v479 = vsel %vm445, %v465, 0.0
        %v480 = vsel %vm446, %v461, 0.0
        %v481 = vsel %vm447, %v465, 0.0
        %v482 = vlaneseq
        %v483 = vshrl.u32 %v482, 7
        %v484 = vsub.s32 2, %v483
        %v485 = vrot.slane %v264, %v484
        %v486 = vlaneseq
        %v487 = vshrl.u32 %v486, 7
        %v488 = vsub.s32 6, %v487
        %v489 = vrot.slane %v264, %v488
        %v490 = vlaneseq
        %v491 = vshrl.u32 %v490, 7
        %v492 = vsub.s32 2, %v491
        %v493 = vrot.slane %v485, %v492
        %v494 = vlaneseq
        %v495 = vshrl.u32 %v494, 7
        %v496 = vsub.s32 2, %v495
        %v497 = vrot.slane %v489, %v496
        %vm498 = vcmp.eq.s32.totalorder %v248, %v493
        %vm499 = vcmp.eq.s32.totalorder %v248, %v497
        %vm500 = vcmp.eq.s32.totalorder %v249, %v493
        %vm501 = vcmp.eq.s32.totalorder %v249, %v497
        %vm502 = vcmp.eq.s32.totalorder %v250, %v493
        %vm503 = vcmp.eq.s32.totalorder %v250, %v497
        %vm504 = vcmp.eq.s32.totalorder %v251, %v493
        %vm505 = vcmp.eq.s32.totalorder %v251, %v497
        %vm506 = vcmp.eq.s32.totalorder %v252, %v493
        %vm507 = vcmp.eq.s32.totalorder %v252, %v497
        %vm508 = vcmp.eq.s32.totalorder %v253, %v493
        %vm509 = vcmp.eq.s32.totalorder %v253, %v497
        %vm510 = vcmp.eq.s32.totalorder %v254, %v493
        %vm511 = vcmp.eq.s32.totalorder %v254, %v497
        %vm512 = vcmp.eq.s32.totalorder %v255, %v493
        %vm513 = vcmp.eq.s32.totalorder %v255, %v497
        %v514 = vlaneseq
        %v515 = vshrl.u32 %v514, 7
        %v516 = vsub.s32 2, %v515
        %v517 = vrot.slane %v229, %v516
        %v518 = vlaneseq
        %v519 = vshrl.u32 %v518, 7
        %v520 = vsub.s32 6, %v519
        %v521 = vrot.slane %v229, %v520
        %v524 = vlaneseq
        %v525 = vshrl.u32 %v524, 7
        %v526 = vsub.s32 2, %v525
        %v527 = vrot.slane %v517, %v526
        %v528 = vlaneseq
        %v529 = vshrl.u32 %v528, 7
        %v530 = vsub.s32 2, %v529
        %v531 = vrot.slane %v521, %v530
        %v532 = vsel %vm498, %v527, 0.0
        %v533 = vsel %vm499, %v531, 0.0
        %v534 = vsel %vm500, %v527, 0.0
        %v535 = vsel %vm501, %v531, 0.0
        %v536 = vsel %vm502, %v527, 0.0
        %v537 = vsel %vm503, %v531, 0.0
        %v538 = vsel %vm504, %v527, 0.0
        %v539 = vsel %vm505, %v531, 0.0
        %v540 = vsel %vm506, %v527, 0.0
        %v541 = vsel %vm507, %v531, 0.0
        %v542 = vsel %vm508, %v527, 0.0
        %v543 = vsel %vm509, %v531, 0.0
        %v544 = vsel %vm510, %v527, 0.0
        %v545 = vsel %vm511, %v531, 0.0
        %v546 = vsel %vm512, %v527, 0.0
        %v547 = vsel %vm513, %v531, 0.0
        %v548 = vadd.f32 %v466, %v532
        %v549 = vadd.f32 %v467, %v533
        %v550 = vadd.f32 %v468, %v534
        %v551 = vadd.f32 %v469, %v535
        %v552 = vadd.f32 %v470, %v536
        %v553 = vadd.f32 %v471, %v537
        %v554 = vadd.f32 %v472, %v538
        %v555 = vadd.f32 %v473, %v539
        %v556 = vadd.f32 %v474, %v540
        %v557 = vadd.f32 %v475, %v541
        %v558 = vadd.f32 %v476, %v542
        %v559 = vadd.f32 %v477, %v543
        %v560 = vadd.f32 %v478, %v544
        %v561 = vadd.f32 %v479, %v545
        %v562 = vadd.f32 %v480, %v546
        %v563 = vadd.f32 %v481, %v547
        %v564 = vmul.f32 %v400, %v548
        %v565 = vmul.f32 %v401, %v549
        %v566 = vmul.f32 %v402, %v550
        %v567 = vmul.f32 %v403, %v551
        %v568 = vmul.f32 %v404, %v552
        %v569 = vmul.f32 %v405, %v553
        %v570 = vmul.f32 %v406, %v554
        %v571 = vmul.f32 %v407, %v555
        %v572 = vmul.f32 %v408, %v556
        %v573 = vmul.f32 %v409, %v557
        %v574 = vmul.f32 %v410, %v558
        %v575 = vmul.f32 %v411, %v559
        %v576 = vmul.f32 %v412, %v560
        %v577 = vmul.f32 %v413, %v561
        %v578 = vmul.f32 %v414, %v562
        %v579 = vmul.f32 %v415, %v563
        %v580 = vlaneseq
        %v581 = vshrl.u32 %v580, 7
        %v582 = vsub.s32 0, %v581
        %v583 = vrot.slane %v259, %v582
        %v584 = vlaneseq
        %v585 = vshrl.u32 %v584, 7
        %v586 = vsub.s32 4, %v585
        %v587 = vrot.slane %v259, %v586
        %v588 = vlaneseq
        %v589 = vshrl.u32 %v588, 7
        %v590 = vsub.s32 0, %v589
        %v591 = vrot.slane %v583, %v590
        %v592 = vlaneseq
        %v593 = vshrl.u32 %v592, 7
        %v594 = vsub.s32 0, %v593
        %v595 = vrot.slane %v587, %v594
        %vm596 = vcmp.eq.s32.totalorder %v232, %v591
        %vm597 = vcmp.eq.s32.totalorder %v232, %v595
        %v598 = vlaneseq
        %v599 = vshrl.u32 %v598, 7
        %v600 = vsub.s32 0, %v599
        %v601 = vrot.slane %v297, %v600
        %v602 = vlaneseq
        %v603 = vshrl.u32 %v602, 7
        %v604 = vsub.s32 4, %v603
        %v605 = vrot.slane %v297, %v604
        %v608 = vlaneseq
        %v609 = vshrl.u32 %v608, 7
        %v610 = vsub.s32 0, %v609
        %v611 = vrot.slane %v601, %v610
        %v612 = vlaneseq
        %v613 = vshrl.u32 %v612, 7
        %v614 = vsub.s32 0, %v613
        %v615 = vrot.slane %v605, %v614
        %v616 = vsel %vm596, %v611, 0.0
        %v617 = vsel %vm597, %v615, 0.0
        %v618 = vlaneseq
        %v619 = vshrl.u32 %v618, 7
        %v620 = vsub.s32 0, %v619
        %v621 = vrot.slane %v264, %v620
        %v622 = vlaneseq
        %v623 = vshrl.u32 %v622, 7
        %v624 = vsub.s32 4, %v623
        %v625 = vrot.slane %v264, %v624
        %v626 = vlaneseq
        %v627 = vshrl.u32 %v626, 7
        %v628 = vsub.s32 0, %v627
        %v629 = vrot.slane %v621, %v628
        %v630 = vlaneseq
        %v631 = vshrl.u32 %v630, 7
        %v632 = vsub.s32 0, %v631
        %v633 = vrot.slane %v625, %v632
        %vm634 = vcmp.eq.s32.totalorder %v232, %v629
        %vm635 = vcmp.eq.s32.totalorder %v232, %v633
        %v636 = vlaneseq
        %v637 = vshrl.u32 %v636, 7
        %v638 = vsub.s32 0, %v637
        %v639 = vrot.slane %v229, %v638
        %v640 = vlaneseq
        %v641 = vshrl.u32 %v640, 7
        %v642 = vsub.s32 4, %v641
        %v643 = vrot.slane %v229, %v642
        %v646 = vlaneseq
        %v647 = vshrl.u32 %v646, 7
        %v648 = vsub.s32 0, %v647
        %v649 = vrot.slane %v639, %v648
        %v650 = vlaneseq
        %v651 = vshrl.u32 %v650, 7
        %v652 = vsub.s32 0, %v651
        %v653 = vrot.slane %v643, %v652
        %v654 = vsel %vm634, %v649, 0.0
        %v655 = vsel %vm635, %v653, 0.0
        %v656 = vadd.f32 %v616, %v654
        %v657 = vadd.f32 %v617, %v655
        %vm658 = vcmask 523264
        %v660 = vsel %vm658, %v224, 0
        %v663 = vsel %vm658, %v225, 0
        %v666 = vsel %vm658, %v226, 0
        %v668 = vand.u32 %v565, 4294901760
        %669 = vmatprep.subr.mxu0 %v668
        %v670 = vand.u32 %v564, 4294901760
        %671 = vmatpush1.msra.mxu0 %v670
        %v672 = vand.u32 %v567, 4294901760
        %673 = vmatprep.subr.mxu0 %v672
        %v674 = vand.u32 %v566, 4294901760
        %675 = vmatpush1.msra.mxu0 %v674
        %v676 = vand.u32 %v569, 4294901760
        %677 = vmatprep.subr.mxu0 %v676
        %v678 = vand.u32 %v568, 4294901760
        %679 = vmatpush1.msra.mxu0 %v678
        %v680 = vand.u32 %v571, 4294901760
        %681 = vmatprep.subr.mxu0 %v680
        %v682 = vand.u32 %v570, 4294901760
        %683 = vmatpush1.msra.mxu0 %v682
        %v684 = vand.u32 %v573, 4294901760
        %685 = vmatprep.subr.mxu0 %v684
        %v686 = vand.u32 %v572, 4294901760
        %687 = vmatpush1.msra.mxu0 %v686
        %v688 = vand.u32 %v575, 4294901760
        %689 = vmatprep.subr.mxu0 %v688
        %v690 = vand.u32 %v574, 4294901760
        %691 = vmatpush1.msra.mxu0 %v690
        %v692 = vand.u32 %v577, 4294901760
        %693 = vmatprep.subr.mxu0 %v692
        %v694 = vand.u32 %v576, 4294901760
        %695 = vmatpush1.msra.mxu0 %v694
        %v696 = vand.u32 %v579, 4294901760
        %697 = vmatprep.subr.mxu0 %v696
        %v698 = vand.u32 %v578, 4294901760
        %699 = vmatpush1.msra.mxu0 %v698
        %700 = vmatprep.subr.mxu0 0.0
        %701 = vmatpush1.msra.mxu0 0.0
        %702 = vmatprep.subr.mxu0 0.0
        %703 = vmatpush1.msra.mxu0 0.0
        %704 = vmatprep.subr.mxu0 0.0
        %705 = vmatpush1.msra.mxu0 0.0
        %706 = vmatprep.subr.mxu0 0.0
        %707 = vmatpush1.msra.mxu0 0.0
        %708 = vmatprep.subr.mxu0 0.0
        %709 = vmatpush1.msra.mxu0 0.0
        %710 = vmatprep.subr.mxu0 0.0
        %711 = vmatpush1.msra.mxu0 0.0
        %712 = vmatprep.subr.mxu0 0.0
        %713 = vmatpush1.msra.mxu0 0.0
        %714 = vmatprep.subr.mxu0 0.0
        %715 = vmatpush1.msra.mxu0 0.0
        %716 = vmatprep.subr.mxu0 0.0
        %717 = vmatpush1.msra.mxu0 0.0
        %718 = vmatprep.subr.mxu0 0.0
        %719 = vmatpush1.msra.mxu0 0.0
        %720 = vmatprep.subr.mxu0 0.0
        %721 = vmatpush1.msra.mxu0 0.0
        %722 = vmatprep.subr.mxu0 0.0
        %723 = vmatpush1.msra.mxu0 0.0
        %724 = vmatprep.subr.mxu0 0.0
        %725 = vmatpush1.msra.mxu0 0.0
        %726 = vmatprep.subr.mxu0 0.0
        %727 = vmatpush1.msra.mxu0 0.0
        %728 = vmatprep.subr.mxu0 0.0
        %729 = vmatpush1.msra.mxu0 0.0
        %730 = vmatprep.subr.mxu0 0.0
        %731 = vmatpush1.msra.mxu0 0.0
        %732 = vmatprep.subr.mxu0 0.0
        %733 = vmatpush1.msra.mxu0 0.0
        %734 = vmatprep.subr.mxu0 0.0
        %735 = vmatpush1.msra.mxu0 0.0
        %736 = vmatprep.subr.mxu0 0.0
        %737 = vmatpush1.msra.mxu0 0.0
        %738 = vmatprep.subr.mxu0 0.0
        %739 = vmatpush1.msra.mxu0 0.0
        %740 = vmatprep.subr.mxu0 0.0
        %741 = vmatpush1.msra.mxu0 0.0
        %742 = vmatprep.subr.mxu0 0.0
        %743 = vmatpush1.msra.mxu0 0.0
        %744 = vmatprep.subr.mxu0 0.0
        %745 = vmatpush1.msra.mxu0 0.0
        %746 = vmatprep.subr.mxu0 0.0
        %747 = vmatpush1.msra.mxu0 0.0
        %748 = vmatprep.mubr.f32.mxu0 0.0
        %v749 = vand.u32 %v660, 4294901760
        %v750 = vsub.f32 %v660, %v749
        %v751 = vand.u32 %v750, 4294901760
        %v752 = vsub.f32 %v750, %v751
        %v753 = vand.u32 %v752, 4294901760
        %754 = vmatmul.mubr.f32.gmra.mrb[0].mxu0 %v753
        %v755 = vpop.f32.mrb[0].mxu0
        %v756 = vadd.f32 0.0, %v755
        %v757 = vpop.f32.mrb[0].mxu0
        %v758 = vadd.f32 0.0, %v757
        %759 = vmatprep.mubr.f32.mxu0 0.0
        %v760 = vand.u32 %v663, 4294901760
        %v761 = vsub.f32 %v663, %v760
        %v762 = vand.u32 %v761, 4294901760
        %v763 = vsub.f32 %v761, %v762
        %v764 = vand.u32 %v763, 4294901760
        %765 = vmatmul.mubr.f32.gmra.mrb[0].mxu0 %v764
        %v766 = vpop.f32.mrb[0].mxu0
        %v767 = vadd.f32 0.0, %v766
        %v768 = vpop.f32.mrb[0].mxu0
        %v769 = vadd.f32 0.0, %v768
        %770 = vmatprep.mubr.f32.mxu0 0.0
        %v771 = vand.u32 %v666, 4294901760
        %v772 = vsub.f32 %v666, %v771
        %v773 = vand.u32 %v772, 4294901760
        %v774 = vsub.f32 %v772, %v773
        %v775 = vand.u32 %v774, 4294901760
        %776 = vmatmul.mubr.f32.gmra.mrb[0].mxu0 %v775
        %v777 = vpop.f32.mrb[0].mxu0
        %v778 = vadd.f32 0.0, %v777
        %v779 = vpop.f32.mrb[0].mxu0
        %v780 = vadd.f32 0.0, %v779
        %781 = vdwg.mxu0
        %v782 = vand.u32 %v565, 4294901760
        %v783 = vsub.f32 %v565, %v782
        %v784 = vand.u32 %v783, 4294901760
        %v785 = vsub.f32 %v783, %v784
        %v786 = vand.u32 %v785, 4294901760
        %787 = vmatprep.subr.mxu0 %v786
        %v788 = vand.u32 %v564, 4294901760
        %v789 = vsub.f32 %v564, %v788
        %v790 = vand.u32 %v789, 4294901760
        %v791 = vsub.f32 %v789, %v790
        %v792 = vand.u32 %v791, 4294901760
        %793 = vmatpush1.msra.mxu0 %v792
        %v794 = vand.u32 %v567, 4294901760
        %v795 = vsub.f32 %v567, %v794
        %v796 = vand.u32 %v795, 4294901760
        %v797 = vsub.f32 %v795, %v796
        %v798 = vand.u32 %v797, 4294901760
        %799 = vmatprep.subr.mxu0 %v798
        %v800 = vand.u32 %v566, 4294901760
        %v801 = vsub.f32 %v566, %v800
        %v802 = vand.u32 %v801, 4294901760
        %v803 = vsub.f32 %v801, %v802
        %v804 = vand.u32 %v803, 4294901760
        %805 = vmatpush1.msra.mxu0 %v804
        %v806 = vand.u32 %v569, 4294901760
        %v807 = vsub.f32 %v569, %v806
        %v808 = vand.u32 %v807, 4294901760
        %v809 = vsub.f32 %v807, %v808
        %v810 = vand.u32 %v809, 4294901760
        %811 = vmatprep.subr.mxu0 %v810
        %v812 = vand.u32 %v568, 4294901760
        %v813 = vsub.f32 %v568, %v812
        %v814 = vand.u32 %v813, 4294901760
        %v815 = vsub.f32 %v813, %v814
        %v816 = vand.u32 %v815, 4294901760
        %817 = vmatpush1.msra.mxu0 %v816
        %v818 = vand.u32 %v571, 4294901760
        %v819 = vsub.f32 %v571, %v818
        %v820 = vand.u32 %v819, 4294901760
        %v821 = vsub.f32 %v819, %v820
        %v822 = vand.u32 %v821, 4294901760
        %823 = vmatprep.subr.mxu0 %v822
        %v824 = vand.u32 %v570, 4294901760
        %v825 = vsub.f32 %v570, %v824
        %v826 = vand.u32 %v825, 4294901760
        %v827 = vsub.f32 %v825, %v826
        %v828 = vand.u32 %v827, 4294901760
        %829 = vmatpush1.msra.mxu0 %v828
        %v830 = vand.u32 %v573, 4294901760
        %v831 = vsub.f32 %v573, %v830
        %v832 = vand.u32 %v831, 4294901760
        %v833 = vsub.f32 %v831, %v832
        %v834 = vand.u32 %v833, 4294901760
        %835 = vmatprep.subr.mxu0 %v834
        %v836 = vand.u32 %v572, 4294901760
        %v837 = vsub.f32 %v572, %v836
        %v838 = vand.u32 %v837, 4294901760
        %v839 = vsub.f32 %v837, %v838
        %v840 = vand.u32 %v839, 4294901760
        %841 = vmatpush1.msra.mxu0 %v840
        %v842 = vand.u32 %v575, 4294901760
        %v843 = vsub.f32 %v575, %v842
        %v844 = vand.u32 %v843, 4294901760
        %v845 = vsub.f32 %v843, %v844
        %v846 = vand.u32 %v845, 4294901760
        %847 = vmatprep.subr.mxu0 %v846
        %v848 = vand.u32 %v574, 4294901760
        %v849 = vsub.f32 %v574, %v848
        %v850 = vand.u32 %v849, 4294901760
        %v851 = vsub.f32 %v849, %v850
        %v852 = vand.u32 %v851, 4294901760
        %853 = vmatpush1.msra.mxu0 %v852
        %v854 = vand.u32 %v577, 4294901760
        %v855 = vsub.f32 %v577, %v854
        %v856 = vand.u32 %v855, 4294901760
        %v857 = vsub.f32 %v855, %v856
        %v858 = vand.u32 %v857, 4294901760
        %859 = vmatprep.subr.mxu0 %v858
        %v860 = vand.u32 %v576, 4294901760
        %v861 = vsub.f32 %v576, %v860
        %v862 = vand.u32 %v861, 4294901760
        %v863 = vsub.f32 %v861, %v862
        %v864 = vand.u32 %v863, 4294901760
        %865 = vmatpush1.msra.mxu0 %v864
        %v866 = vand.u32 %v579, 4294901760
        %v867 = vsub.f32 %v579, %v866
        %v868 = vand.u32 %v867, 4294901760
        %v869 = vsub.f32 %v867, %v868
        %v870 = vand.u32 %v869, 4294901760
        %871 = vmatprep.subr.mxu0 %v870
        %v872 = vand.u32 %v578, 4294901760
        %v873 = vsub.f32 %v578, %v872
        %v874 = vand.u32 %v873, 4294901760
        %v875 = vsub.f32 %v873, %v874
        %v876 = vand.u32 %v875, 4294901760
        %877 = vmatpush1.msra.mxu0 %v876
        %878 = vmatprep.subr.mxu0 0.0
        %879 = vmatpush1.msra.mxu0 0.0
        %880 = vmatprep.subr.mxu0 0.0
        %881 = vmatpush1.msra.mxu0 0.0
        %882 = vmatprep.subr.mxu0 0.0
        %883 = vmatpush1.msra.mxu0 0.0
        %884 = vmatprep.subr.mxu0 0.0
        %885 = vmatpush1.msra.mxu0 0.0
        %886 = vmatprep.subr.mxu0 0.0
        %887 = vmatpush1.msra.mxu0 0.0
        %888 = vmatprep.subr.mxu0 0.0
        %889 = vmatpush1.msra.mxu0 0.0
        %890 = vmatprep.subr.mxu0 0.0
        %891 = vmatpush1.msra.mxu0 0.0
        %892 = vmatprep.subr.mxu0 0.0
        %893 = vmatpush1.msra.mxu0 0.0
        %894 = vmatprep.subr.mxu0 0.0
        %895 = vmatpush1.msra.mxu0 0.0
        %896 = vmatprep.subr.mxu0 0.0
        %897 = vmatpush1.msra.mxu0 0.0
        %898 = vmatprep.subr.mxu0 0.0
        %899 = vmatpush1.msra.mxu0 0.0
        %900 = vmatprep.subr.mxu0 0.0
        %901 = vmatpush1.msra.mxu0 0.0
        %902 = vmatprep.subr.mxu0 0.0
        %903 = vmatpush1.msra.mxu0 0.0
        %904 = vmatprep.subr.mxu0 0.0
        %905 = vmatpush1.msra.mxu0 0.0
        %906 = vmatprep.subr.mxu0 0.0
        %907 = vmatpush1.msra.mxu0 0.0
        %908 = vmatprep.subr.mxu0 0.0
        %909 = vmatpush1.msra.mxu0 0.0
        %910 = vmatprep.subr.mxu0 0.0
        %911 = vmatpush1.msra.mxu0 0.0
        %912 = vmatprep.subr.mxu0 0.0
        %913 = vmatpush1.msra.mxu0 0.0
        %914 = vmatprep.subr.mxu0 0.0
        %915 = vmatpush1.msra.mxu0 0.0
        %916 = vmatprep.subr.mxu0 0.0
        %917 = vmatpush1.msra.mxu0 0.0
        %918 = vmatprep.subr.mxu0 0.0
        %919 = vmatpush1.msra.mxu0 0.0
        %920 = vmatprep.subr.mxu0 0.0
        %921 = vmatpush1.msra.mxu0 0.0
        %922 = vmatprep.subr.mxu0 0.0
        %923 = vmatpush1.msra.mxu0 0.0
        %924 = vmatprep.subr.mxu0 0.0
        %925 = vmatpush1.msra.mxu0 0.0
        %926 = vmatprep.mubr.f32.mxu0 0.0
        %v927 = vand.u32 %v660, 4294901760
        %928 = vmatmul.mubr.f32.gmra.mrb[0].mxu0 %v927
        %v929 = vpop.f32.mrb[0].mxu0
        %v930 = vadd.f32 %v756, %v929
        %v931 = vpop.f32.mrb[0].mxu0
        %v932 = vadd.f32 %v758, %v931
        %933 = vmatprep.mubr.f32.mxu0 0.0
        %v934 = vand.u32 %v663, 4294901760
        %935 = vmatmul.mubr.f32.gmra.mrb[0].mxu0 %v934
        %v936 = vpop.f32.mrb[0].mxu0
        %v937 = vadd.f32 %v767, %v936
        %v938 = vpop.f32.mrb[0].mxu0
        %v939 = vadd.f32 %v769, %v938
        %940 = vmatprep.mubr.f32.mxu0 0.0
        %v941 = vand.u32 %v666, 4294901760
        %942 = vmatmul.mubr.f32.gmra.mrb[0].mxu0 %v941
        %v943 = vpop.f32.mrb[0].mxu0
        %v944 = vadd.f32 %v778, %v943
        %v945 = vpop.f32.mrb[0].mxu0
        %v946 = vadd.f32 %v780, %v945
        %947 = vdwg.mxu0
        %v948 = vand.u32 %v565, 4294901760
        %v949 = vsub.f32 %v565, %v948
        %950 = vmatprep.subr.mxu0 %v949
        %v951 = vand.u32 %v564, 4294901760
        %v952 = vsub.f32 %v564, %v951
        %953 = vmatpush1.msra.mxu0 %v952
        %v954 = vand.u32 %v567, 4294901760
        %v955 = vsub.f32 %v567, %v954
        %956 = vmatprep.subr.mxu0 %v955
        %v957 = vand.u32 %v566, 4294901760
        %v958 = vsub.f32 %v566, %v957
        %959 = vmatpush1.msra.mxu0 %v958
        %v960 = vand.u32 %v569, 4294901760
        %v961 = vsub.f32 %v569, %v960
        %962 = vmatprep.subr.mxu0 %v961
        %v963 = vand.u32 %v568, 4294901760
        %v964 = vsub.f32 %v568, %v963
        %965 = vmatpush1.msra.mxu0 %v964
        %v966 = vand.u32 %v571, 4294901760
        %v967 = vsub.f32 %v571, %v966
        %968 = vmatprep.subr.mxu0 %v967
        %v969 = vand.u32 %v570, 4294901760
        %v970 = vsub.f32 %v570, %v969
        %971 = vmatpush1.msra.mxu0 %v970
        %v972 = vand.u32 %v573, 4294901760
        %v973 = vsub.f32 %v573, %v972
        %974 = vmatprep.subr.mxu0 %v973
        %v975 = vand.u32 %v572, 4294901760
        %v976 = vsub.f32 %v572, %v975
        %977 = vmatpush1.msra.mxu0 %v976
        %v978 = vand.u32 %v575, 4294901760
        %v979 = vsub.f32 %v575, %v978
        %980 = vmatprep.subr.mxu0 %v979
        %v981 = vand.u32 %v574, 4294901760
        %v982 = vsub.f32 %v574, %v981
        %983 = vmatpush1.msra.mxu0 %v982
        %v984 = vand.u32 %v577, 4294901760
        %v985 = vsub.f32 %v577, %v984
        %986 = vmatprep.subr.mxu0 %v985
        %v987 = vand.u32 %v576, 4294901760
        %v988 = vsub.f32 %v576, %v987
        %989 = vmatpush1.msra.mxu0 %v988
        %v990 = vand.u32 %v579, 4294901760
        %v991 = vsub.f32 %v579, %v990
        %992 = vmatprep.subr.mxu0 %v991
        %v993 = vand.u32 %v578, 4294901760
        %v994 = vsub.f32 %v578, %v993
        %995 = vmatpush1.msra.mxu0 %v994
        %996 = vmatprep.subr.mxu0 0.0
        %997 = vmatpush1.msra.mxu0 0.0
        %998 = vmatprep.subr.mxu0 0.0
        %999 = vmatpush1.msra.mxu0 0.0
        %1000 = vmatprep.subr.mxu0 0.0
        %1001 = vmatpush1.msra.mxu0 0.0
        %1002 = vmatprep.subr.mxu0 0.0
        %1003 = vmatpush1.msra.mxu0 0.0
        %1004 = vmatprep.subr.mxu0 0.0
        %1005 = vmatpush1.msra.mxu0 0.0
        %1006 = vmatprep.subr.mxu0 0.0
        %1007 = vmatpush1.msra.mxu0 0.0
        %1008 = vmatprep.subr.mxu0 0.0
        %1009 = vmatpush1.msra.mxu0 0.0
        %1010 = vmatprep.subr.mxu0 0.0
        %1011 = vmatpush1.msra.mxu0 0.0
        %1012 = vmatprep.subr.mxu0 0.0
        %1013 = vmatpush1.msra.mxu0 0.0
        %1014 = vmatprep.subr.mxu0 0.0
        %1015 = vmatpush1.msra.mxu0 0.0
        %1016 = vmatprep.subr.mxu0 0.0
        %1017 = vmatpush1.msra.mxu0 0.0
        %1018 = vmatprep.subr.mxu0 0.0
        %1019 = vmatpush1.msra.mxu0 0.0
        %1020 = vmatprep.subr.mxu0 0.0
        %1021 = vmatpush1.msra.mxu0 0.0
        %1022 = vmatprep.subr.mxu0 0.0
        %1023 = vmatpush1.msra.mxu0 0.0
        %1024 = vmatprep.subr.mxu0 0.0
        %1025 = vmatpush1.msra.mxu0 0.0
        %1026 = vmatprep.subr.mxu0 0.0
        %1027 = vmatpush1.msra.mxu0 0.0
        %1028 = vmatprep.subr.mxu0 0.0
        %1029 = vmatpush1.msra.mxu0 0.0
        %1030 = vmatprep.subr.mxu0 0.0
        %1031 = vmatpush1.msra.mxu0 0.0
        %1032 = vmatprep.subr.mxu0 0.0
        %1033 = vmatpush1.msra.mxu0 0.0
        %1034 = vmatprep.subr.mxu0 0.0
        %1035 = vmatpush1.msra.mxu0 0.0
        %1036 = vmatprep.subr.mxu0 0.0
        %1037 = vmatpush1.msra.mxu0 0.0
        %1038 = vmatprep.subr.mxu0 0.0
        %1039 = vmatpush1.msra.mxu0 0.0
        %1040 = vmatprep.subr.mxu0 0.0
        %1041 = vmatpush1.msra.mxu0 0.0
        %1042 = vmatprep.subr.mxu0 0.0
        %1043 = vmatpush1.msra.mxu0 0.0
        %1044 = vmatprep.mubr.f32.mxu0 0.0
        %v1045 = vand.u32 %v660, 4294901760
        %v1046 = vsub.f32 %v660, %v1045
        %1047 = vmatmul.mubr.f32.gmra.mrb[0].mxu0 %v1046
        %v1048 = vpop.f32.mrb[0].mxu0
        %v1049 = vadd.f32 %v930, %v1048
        %v1050 = vpop.f32.mrb[0].mxu0
        %v1051 = vadd.f32 %v932, %v1050
        %1052 = vmatprep.mubr.f32.mxu0 0.0
        %v1053 = vand.u32 %v663, 4294901760
        %v1054 = vsub.f32 %v663, %v1053
        %1055 = vmatmul.mubr.f32.gmra.mrb[0].mxu0 %v1054
        %v1056 = vpop.f32.mrb[0].mxu0
        %v1057 = vadd.f32 %v937, %v1056
        %v1058 = vpop.f32.mrb[0].mxu0
        %v1059 = vadd.f32 %v939, %v1058
        %1060 = vmatprep.mubr.f32.mxu0 0.0
        %v1061 = vand.u32 %v666, 4294901760
        %v1062 = vsub.f32 %v666, %v1061
        %1063 = vmatmul.mubr.f32.gmra.mrb[0].mxu0 %v1062
        %v1064 = vpop.f32.mrb[0].mxu0
        %v1065 = vadd.f32 %v944, %v1064
        %v1066 = vpop.f32.mrb[0].mxu0
        %v1067 = vadd.f32 %v946, %v1066
        %1068 = vdwg.mxu0
        %v1069 = vand.u32 %v565, 4294901760
        %1070 = vmatprep.subr.mxu0 %v1069
        %v1071 = vand.u32 %v564, 4294901760
        %1072 = vmatpush1.msra.mxu0 %v1071
        %v1073 = vand.u32 %v567, 4294901760
        %1074 = vmatprep.subr.mxu0 %v1073
        %v1075 = vand.u32 %v566, 4294901760
        %1076 = vmatpush1.msra.mxu0 %v1075
        %v1077 = vand.u32 %v569, 4294901760
        %1078 = vmatprep.subr.mxu0 %v1077
        %v1079 = vand.u32 %v568, 4294901760
        %1080 = vmatpush1.msra.mxu0 %v1079
        %v1081 = vand.u32 %v571, 4294901760
        %1082 = vmatprep.subr.mxu0 %v1081
        %v1083 = vand.u32 %v570, 4294901760
        %1084 = vmatpush1.msra.mxu0 %v1083
        %v1085 = vand.u32 %v573, 4294901760
        %1086 = vmatprep.subr.mxu0 %v1085
        %v1087 = vand.u32 %v572, 4294901760
        %1088 = vmatpush1.msra.mxu0 %v1087
        %v1089 = vand.u32 %v575, 4294901760
        %1090 = vmatprep.subr.mxu0 %v1089
        %v1091 = vand.u32 %v574, 4294901760
        %1092 = vmatpush1.msra.mxu0 %v1091
        %v1093 = vand.u32 %v577, 4294901760
        %1094 = vmatprep.subr.mxu0 %v1093
        %v1095 = vand.u32 %v576, 4294901760
        %1096 = vmatpush1.msra.mxu0 %v1095
        %v1097 = vand.u32 %v579, 4294901760
        %1098 = vmatprep.subr.mxu0 %v1097
        %v1099 = vand.u32 %v578, 4294901760
        %1100 = vmatpush1.msra.mxu0 %v1099
        %1101 = vmatprep.subr.mxu0 0.0
        %1102 = vmatpush1.msra.mxu0 0.0
        %1103 = vmatprep.subr.mxu0 0.0
        %1104 = vmatpush1.msra.mxu0 0.0
        %1105 = vmatprep.subr.mxu0 0.0
        %1106 = vmatpush1.msra.mxu0 0.0
        %1107 = vmatprep.subr.mxu0 0.0
        %1108 = vmatpush1.msra.mxu0 0.0
        %1109 = vmatprep.subr.mxu0 0.0
        %1110 = vmatpush1.msra.mxu0 0.0
        %1111 = vmatprep.subr.mxu0 0.0
        %1112 = vmatpush1.msra.mxu0 0.0
        %1113 = vmatprep.subr.mxu0 0.0
        %1114 = vmatpush1.msra.mxu0 0.0
        %1115 = vmatprep.subr.mxu0 0.0
        %1116 = vmatpush1.msra.mxu0 0.0
        %1117 = vmatprep.subr.mxu0 0.0
        %1118 = vmatpush1.msra.mxu0 0.0
        %1119 = vmatprep.subr.mxu0 0.0
        %1120 = vmatpush1.msra.mxu0 0.0
        %1121 = vmatprep.subr.mxu0 0.0
        %1122 = vmatpush1.msra.mxu0 0.0
        %1123 = vmatprep.subr.mxu0 0.0
        %1124 = vmatpush1.msra.mxu0 0.0
        %1125 = vmatprep.subr.mxu0 0.0
        %1126 = vmatpush1.msra.mxu0 0.0
        %1127 = vmatprep.subr.mxu0 0.0
        %1128 = vmatpush1.msra.mxu0 0.0
        %1129 = vmatprep.subr.mxu0 0.0
        %1130 = vmatpush1.msra.mxu0 0.0
        %1131 = vmatprep.subr.mxu0 0.0
        %1132 = vmatpush1.msra.mxu0 0.0
        %1133 = vmatprep.subr.mxu0 0.0
        %1134 = vmatpush1.msra.mxu0 0.0
        %1135 = vmatprep.subr.mxu0 0.0
        %1136 = vmatpush1.msra.mxu0 0.0
        %1137 = vmatprep.subr.mxu0 0.0
        %1138 = vmatpush1.msra.mxu0 0.0
        %1139 = vmatprep.subr.mxu0 0.0
        %1140 = vmatpush1.msra.mxu0 0.0
        %1141 = vmatprep.subr.mxu0 0.0
        %1142 = vmatpush1.msra.mxu0 0.0
        %1143 = vmatprep.subr.mxu0 0.0
        %1144 = vmatpush1.msra.mxu0 0.0
        %1145 = vmatprep.subr.mxu0 0.0
        %1146 = vmatpush1.msra.mxu0 0.0
        %1147 = vmatprep.subr.mxu0 0.0
        %1148 = vmatpush1.msra.mxu0 0.0
        %1149 = vmatprep.mubr.f32.mxu0 0.0
        %v1150 = vand.u32 %v660, 4294901760
        %v1151 = vsub.f32 %v660, %v1150
        %v1152 = vand.u32 %v1151, 4294901760
        %1153 = vmatmul.mubr.f32.gmra.mrb[0].mxu0 %v1152
        %v1154 = vpop.f32.mrb[0].mxu0
        %v1155 = vadd.f32 %v1049, %v1154
        %v1156 = vpop.f32.mrb[0].mxu0
        %v1157 = vadd.f32 %v1051, %v1156
        %1158 = vmatprep.mubr.f32.mxu0 0.0
        %v1159 = vand.u32 %v663, 4294901760
        %v1160 = vsub.f32 %v663, %v1159
        %v1161 = vand.u32 %v1160, 4294901760
        %1162 = vmatmul.mubr.f32.gmra.mrb[0].mxu0 %v1161
        %v1163 = vpop.f32.mrb[0].mxu0
        %v1164 = vadd.f32 %v1057, %v1163
        %v1165 = vpop.f32.mrb[0].mxu0
        %v1166 = vadd.f32 %v1059, %v1165
        %1167 = vmatprep.mubr.f32.mxu0 0.0
        %v1168 = vand.u32 %v666, 4294901760
        %v1169 = vsub.f32 %v666, %v1168
        %v1170 = vand.u32 %v1169, 4294901760
        %1171 = vmatmul.mubr.f32.gmra.mrb[0].mxu0 %v1170
        %v1172 = vpop.f32.mrb[0].mxu0
        %v1173 = vadd.f32 %v1065, %v1172
        %v1174 = vpop.f32.mrb[0].mxu0
        %v1175 = vadd.f32 %v1067, %v1174
        %1176 = vdwg.mxu0
        %v1177 = vand.u32 %v565, 4294901760
        %v1178 = vsub.f32 %v565, %v1177
        %v1179 = vand.u32 %v1178, 4294901760
        %1180 = vmatprep.subr.mxu0 %v1179
        %v1181 = vand.u32 %v564, 4294901760
        %v1182 = vsub.f32 %v564, %v1181
        %v1183 = vand.u32 %v1182, 4294901760
        %1184 = vmatpush1.msra.mxu0 %v1183
        %v1185 = vand.u32 %v567, 4294901760
        %v1186 = vsub.f32 %v567, %v1185
        %v1187 = vand.u32 %v1186, 4294901760
        %1188 = vmatprep.subr.mxu0 %v1187
        %v1189 = vand.u32 %v566, 4294901760
        %v1190 = vsub.f32 %v566, %v1189
        %v1191 = vand.u32 %v1190, 4294901760
        %1192 = vmatpush1.msra.mxu0 %v1191
        %v1193 = vand.u32 %v569, 4294901760
        %v1194 = vsub.f32 %v569, %v1193
        %v1195 = vand.u32 %v1194, 4294901760
        %1196 = vmatprep.subr.mxu0 %v1195
        %v1197 = vand.u32 %v568, 4294901760
        %v1198 = vsub.f32 %v568, %v1197
        %v1199 = vand.u32 %v1198, 4294901760
        %1200 = vmatpush1.msra.mxu0 %v1199
        %v1201 = vand.u32 %v571, 4294901760
        %v1202 = vsub.f32 %v571, %v1201
        %v1203 = vand.u32 %v1202, 4294901760
        %1204 = vmatprep.subr.mxu0 %v1203
        %v1205 = vand.u32 %v570, 4294901760
        %v1206 = vsub.f32 %v570, %v1205
        %v1207 = vand.u32 %v1206, 4294901760
        %1208 = vmatpush1.msra.mxu0 %v1207
        %v1209 = vand.u32 %v573, 4294901760
        %v1210 = vsub.f32 %v573, %v1209
        %v1211 = vand.u32 %v1210, 4294901760
        %1212 = vmatprep.subr.mxu0 %v1211
        %v1213 = vand.u32 %v572, 4294901760
        %v1214 = vsub.f32 %v572, %v1213
        %v1215 = vand.u32 %v1214, 4294901760
        %1216 = vmatpush1.msra.mxu0 %v1215
        %v1217 = vand.u32 %v575, 4294901760
        %v1218 = vsub.f32 %v575, %v1217
        %v1219 = vand.u32 %v1218, 4294901760
        %1220 = vmatprep.subr.mxu0 %v1219
        %v1221 = vand.u32 %v574, 4294901760
        %v1222 = vsub.f32 %v574, %v1221
        %v1223 = vand.u32 %v1222, 4294901760
        %1224 = vmatpush1.msra.mxu0 %v1223
        %v1225 = vand.u32 %v577, 4294901760
        %v1226 = vsub.f32 %v577, %v1225
        %v1227 = vand.u32 %v1226, 4294901760
        %1228 = vmatprep.subr.mxu0 %v1227
        %v1229 = vand.u32 %v576, 4294901760
        %v1230 = vsub.f32 %v576, %v1229
        %v1231 = vand.u32 %v1230, 4294901760
        %1232 = vmatpush1.msra.mxu0 %v1231
        %v1233 = vand.u32 %v579, 4294901760
        %v1234 = vsub.f32 %v579, %v1233
        %v1235 = vand.u32 %v1234, 4294901760
        %1236 = vmatprep.subr.mxu0 %v1235
        %v1237 = vand.u32 %v578, 4294901760
        %v1238 = vsub.f32 %v578, %v1237
        %v1239 = vand.u32 %v1238, 4294901760
        %1240 = vmatpush1.msra.mxu0 %v1239
        %1241 = vmatprep.subr.mxu0 0.0
        %1242 = vmatpush1.msra.mxu0 0.0
        %1243 = vmatprep.subr.mxu0 0.0
        %1244 = vmatpush1.msra.mxu0 0.0
        %1245 = vmatprep.subr.mxu0 0.0
        %1246 = vmatpush1.msra.mxu0 0.0
        %1247 = vmatprep.subr.mxu0 0.0
        %1248 = vmatpush1.msra.mxu0 0.0
        %1249 = vmatprep.subr.mxu0 0.0
        %1250 = vmatpush1.msra.mxu0 0.0
        %1251 = vmatprep.subr.mxu0 0.0
        %1252 = vmatpush1.msra.mxu0 0.0
        %1253 = vmatprep.subr.mxu0 0.0
        %1254 = vmatpush1.msra.mxu0 0.0
        %1255 = vmatprep.subr.mxu0 0.0
        %1256 = vmatpush1.msra.mxu0 0.0
        %1257 = vmatprep.subr.mxu0 0.0
        %1258 = vmatpush1.msra.mxu0 0.0
        %1259 = vmatprep.subr.mxu0 0.0
        %1260 = vmatpush1.msra.mxu0 0.0
        %1261 = vmatprep.subr.mxu0 0.0
        %1262 = vmatpush1.msra.mxu0 0.0
        %1263 = vmatprep.subr.mxu0 0.0
        %1264 = vmatpush1.msra.mxu0 0.0
        %1265 = vmatprep.subr.mxu0 0.0
        %1266 = vmatpush1.msra.mxu0 0.0
        %1267 = vmatprep.subr.mxu0 0.0
        %1268 = vmatpush1.msra.mxu0 0.0
        %1269 = vmatprep.subr.mxu0 0.0
        %1270 = vmatpush1.msra.mxu0 0.0
        %1271 = vmatprep.subr.mxu0 0.0
        %1272 = vmatpush1.msra.mxu0 0.0
        %1273 = vmatprep.subr.mxu0 0.0
        %1274 = vmatpush1.msra.mxu0 0.0
        %1275 = vmatprep.subr.mxu0 0.0
        %1276 = vmatpush1.msra.mxu0 0.0
        %1277 = vmatprep.subr.mxu0 0.0
        %1278 = vmatpush1.msra.mxu0 0.0
        %1279 = vmatprep.subr.mxu0 0.0
        %1280 = vmatpush1.msra.mxu0 0.0
        %1281 = vmatprep.subr.mxu0 0.0
        %1282 = vmatpush1.msra.mxu0 0.0
        %1283 = vmatprep.subr.mxu0 0.0
        %1284 = vmatpush1.msra.mxu0 0.0
        %1285 = vmatprep.subr.mxu0 0.0
        %1286 = vmatpush1.msra.mxu0 0.0
        %1287 = vmatprep.subr.mxu0 0.0
        %1288 = vmatpush1.msra.mxu0 0.0
        %1289 = vmatprep.mubr.f32.mxu0 0.0
        %v1290 = vand.u32 %v660, 4294901760
        %1291 = vmatmul.mubr.f32.gmra.mrb[0].mxu0 %v1290
        %v1292 = vpop.f32.mrb[0].mxu0
        %v1293 = vadd.f32 %v1155, %v1292
        %v1294 = vpop.f32.mrb[0].mxu0
        %v1295 = vadd.f32 %v1157, %v1294
        %1296 = vmatprep.mubr.f32.mxu0 0.0
        %v1297 = vand.u32 %v663, 4294901760
        %1298 = vmatmul.mubr.f32.gmra.mrb[0].mxu0 %v1297
        %v1299 = vpop.f32.mrb[0].mxu0
        %v1300 = vadd.f32 %v1164, %v1299
        %v1301 = vpop.f32.mrb[0].mxu0
        %v1302 = vadd.f32 %v1166, %v1301
        %1303 = vmatprep.mubr.f32.mxu0 0.0
        %v1304 = vand.u32 %v666, 4294901760
        %1305 = vmatmul.mubr.f32.gmra.mrb[0].mxu0 %v1304
        %v1306 = vpop.f32.mrb[0].mxu0
        %v1307 = vadd.f32 %v1173, %v1306
        %v1308 = vpop.f32.mrb[0].mxu0
        %v1309 = vadd.f32 %v1175, %v1308
        %1310 = vdwg.mxu0
        %v1311 = vand.u32 %v565, 4294901760
        %1312 = vmatprep.subr.mxu0 %v1311
        %v1313 = vand.u32 %v564, 4294901760
        %1314 = vmatpush1.msra.mxu0 %v1313
        %v1315 = vand.u32 %v567, 4294901760
        %1316 = vmatprep.subr.mxu0 %v1315
        %v1317 = vand.u32 %v566, 4294901760
        %1318 = vmatpush1.msra.mxu0 %v1317
        %v1319 = vand.u32 %v569, 4294901760
        %1320 = vmatprep.subr.mxu0 %v1319
        %v1321 = vand.u32 %v568, 4294901760
        %1322 = vmatpush1.msra.mxu0 %v1321
        %v1323 = vand.u32 %v571, 4294901760
        %1324 = vmatprep.subr.mxu0 %v1323
        %v1325 = vand.u32 %v570, 4294901760
        %1326 = vmatpush1.msra.mxu0 %v1325
        %v1327 = vand.u32 %v573, 4294901760
        %1328 = vmatprep.subr.mxu0 %v1327
        %v1329 = vand.u32 %v572, 4294901760
        %1330 = vmatpush1.msra.mxu0 %v1329
        %v1331 = vand.u32 %v575, 4294901760
        %1332 = vmatprep.subr.mxu0 %v1331
        %v1333 = vand.u32 %v574, 4294901760
        %1334 = vmatpush1.msra.mxu0 %v1333
        %v1335 = vand.u32 %v577, 4294901760
        %1336 = vmatprep.subr.mxu0 %v1335
        %v1337 = vand.u32 %v576, 4294901760
        %1338 = vmatpush1.msra.mxu0 %v1337
        %v1339 = vand.u32 %v579, 4294901760
        %1340 = vmatprep.subr.mxu0 %v1339
        %v1341 = vand.u32 %v578, 4294901760
        %1342 = vmatpush1.msra.mxu0 %v1341
        %1343 = vmatprep.subr.mxu0 0.0
        %1344 = vmatpush1.msra.mxu0 0.0
        %1345 = vmatprep.subr.mxu0 0.0
        %1346 = vmatpush1.msra.mxu0 0.0
        %1347 = vmatprep.subr.mxu0 0.0
        %1348 = vmatpush1.msra.mxu0 0.0
        %1349 = vmatprep.subr.mxu0 0.0
        %1350 = vmatpush1.msra.mxu0 0.0
        %1351 = vmatprep.subr.mxu0 0.0
        %1352 = vmatpush1.msra.mxu0 0.0
        %1353 = vmatprep.subr.mxu0 0.0
        %1354 = vmatpush1.msra.mxu0 0.0
        %1355 = vmatprep.subr.mxu0 0.0
        %1356 = vmatpush1.msra.mxu0 0.0
        %1357 = vmatprep.subr.mxu0 0.0
        %1358 = vmatpush1.msra.mxu0 0.0
        %1359 = vmatprep.subr.mxu0 0.0
        %1360 = vmatpush1.msra.mxu0 0.0
        %1361 = vmatprep.subr.mxu0 0.0
        %1362 = vmatpush1.msra.mxu0 0.0
        %1363 = vmatprep.subr.mxu0 0.0
        %1364 = vmatpush1.msra.mxu0 0.0
        %1365 = vmatprep.subr.mxu0 0.0
        %1366 = vmatpush1.msra.mxu0 0.0
        %1367 = vmatprep.subr.mxu0 0.0
        %1368 = vmatpush1.msra.mxu0 0.0
        %1369 = vmatprep.subr.mxu0 0.0
        %1370 = vmatpush1.msra.mxu0 0.0
        %1371 = vmatprep.subr.mxu0 0.0
        %1372 = vmatpush1.msra.mxu0 0.0
        %1373 = vmatprep.subr.mxu0 0.0
        %1374 = vmatpush1.msra.mxu0 0.0
        %1375 = vmatprep.subr.mxu0 0.0
        %1376 = vmatpush1.msra.mxu0 0.0
        %1377 = vmatprep.subr.mxu0 0.0
        %1378 = vmatpush1.msra.mxu0 0.0
        %1379 = vmatprep.subr.mxu0 0.0
        %1380 = vmatpush1.msra.mxu0 0.0
        %1381 = vmatprep.subr.mxu0 0.0
        %1382 = vmatpush1.msra.mxu0 0.0
        %1383 = vmatprep.subr.mxu0 0.0
        %1384 = vmatpush1.msra.mxu0 0.0
        %1385 = vmatprep.subr.mxu0 0.0
        %1386 = vmatpush1.msra.mxu0 0.0
        %1387 = vmatprep.subr.mxu0 0.0
        %1388 = vmatpush1.msra.mxu0 0.0
        %1389 = vmatprep.subr.mxu0 0.0
        %1390 = vmatpush1.msra.mxu0 0.0
        %1391 = vmatprep.mubr.f32.mxu0 0.0
        %v1392 = vand.u32 %v660, 4294901760
        %1393 = vmatmul.mubr.f32.gmra.mrb[0].mxu0 %v1392
        %v1394 = vpop.f32.mrb[0].mxu0
        %v1395 = vadd.f32 %v1293, %v1394
        %v1396 = vpop.f32.mrb[0].mxu0
        %v1397 = vadd.f32 %v1295, %v1396
        %1398 = vmatprep.mubr.f32.mxu0 0.0
        %v1399 = vand.u32 %v663, 4294901760
        %1400 = vmatmul.mubr.f32.gmra.mrb[0].mxu0 %v1399
        %v1401 = vpop.f32.mrb[0].mxu0
        %v1402 = vadd.f32 %v1300, %v1401
        %v1403 = vpop.f32.mrb[0].mxu0
        %v1404 = vadd.f32 %v1302, %v1403
        %1405 = vmatprep.mubr.f32.mxu0 0.0
        %v1406 = vand.u32 %v666, 4294901760
        %1407 = vmatmul.mubr.f32.gmra.mrb[0].mxu0 %v1406
        %v1408 = vpop.f32.mrb[0].mxu0
        %v1409 = vadd.f32 %v1307, %v1408
        %v1410 = vpop.f32.mrb[0].mxu0
        %v1411 = vadd.f32 %v1309, %v1410
        %1412 = vdwg.mxu0
        %v1413 = vmul.f32 %v1395, %v656
        %v1414 = vmul.f32 %v1397, %v657
        %v1415 = vrot.slane %v1413, 4
        %v1416 = vadd.f32 %v1413, %v1415
        %v1417 = vrot.slane %v1416, 2
        %v1418 = vadd.f32 %v1416, %v1417
        %v1419 = vrot.slane %v1418, 1
        %v1420 = vadd.f32 %v1418, %v1419
        %v1421 = vrot.slane %v1414, 4
        %v1422 = vadd.f32 %v1414, %v1421
        %v1423 = vrot.slane %v1422, 2
        %v1424 = vadd.f32 %v1422, %v1423
        %v1425 = vrot.slane %v1424, 1
        %v1426 = vadd.f32 %v1424, %v1425
        %v1427 = vmul.f32 %v1402, %v656
        %v1428 = vmul.f32 %v1404, %v657
        %v1429 = vrot.slane %v1427, 4
        %v1430 = vadd.f32 %v1427, %v1429
        %v1431 = vrot.slane %v1430, 2
        %v1432 = vadd.f32 %v1430, %v1431
        %v1433 = vrot.slane %v1432, 1
        %v1434 = vadd.f32 %v1432, %v1433
        %v1435 = vrot.slane %v1428, 4
        %v1436 = vadd.f32 %v1428, %v1435
        %v1437 = vrot.slane %v1436, 2
        %v1438 = vadd.f32 %v1436, %v1437
        %v1439 = vrot.slane %v1438, 1
        %v1440 = vadd.f32 %v1438, %v1439
        %v1441 = vmul.f32 %v1409, %v656
        %v1442 = vmul.f32 %v1411, %v657
        %v1443 = vrot.slane %v1441, 4
        %v1444 = vadd.f32 %v1441, %v1443
        %v1445 = vrot.slane %v1444, 2
        %v1446 = vadd.f32 %v1444, %v1445
        %v1447 = vrot.slane %v1446, 1
        %v1448 = vadd.f32 %v1446, %v1447
        %v1449 = vrot.slane %v1442, 4
        %v1450 = vadd.f32 %v1442, %v1449
        %v1451 = vrot.slane %v1450, 2
        %v1452 = vadd.f32 %v1450, %v1451
        %v1453 = vrot.slane %v1452, 1
        %v1454 = vadd.f32 %v1452, %v1453
        %vm1455 = vcmask 1040384
        %v1456 = vsel %vm1455, %v1420, %v1434
        %v1457 = vsel %vm1455, %v1426, %v1440
        %vm1458 = vcmask 1041408
        %v1459 = vsel %vm1458, %v1456, %v1448
        %v1460 = vsel %vm1458, %v1457, %v1454
        %v1463 = vcombine.low %v1459, %v1460
        %1465 = vst [vmem:[%s221] sm:$0x77] %v1463
        %s1466 = smul.u32 2, %s21
        %p1467 = scmp.lt.s32.totalorder %s20, 1
        %s1468 = scalar_select %p1467, %s20, 1
        %p1469 = scmp.lt.s32.totalorder %s1466, 1
        %s1470 = scalar_select %p1469, %s1466, 1
        %s1471 = smul.addr %s1468, 2
        %s1472 = sadd.s32 %s1470, %s1471
        %s1473 = smul.addr %s1472, 4
        %s1474 = scalar_lea.vmem %s2, %s1473
        // Predicated region
        $region33: #{tpu_custom_call.1} parent=27 // pred_check
          %p1475 = pneg %p102
        $region34: #{tpu_custom_call.1} parent=27 // pred_check_branch
          %1477 = sbr.rel (%p1475) target = $region36
        $region35: #{tpu_custom_call.1} parent=27 // pred_region
          %s1478 = smul.u32 2, %s21
        $region36: #{tpu_custom_call.1} parent=27 // pred_fallthru
          _
      $region28: #{tpu_custom_call.1} parent=5 // pred_fallthru
        _
      %p1479 = scmp.le.s32.totalorder 2, %s11
      // Predicated region
      $region37: #{tpu_custom_call.1} parent=5 // pred_check
        %p1480 = pneg %p1479
      $region38: #{tpu_custom_call.1} parent=5 // pred_check_branch
        %1482 = sbr.rel (%p1480) target = $region40
      $region39: #{tpu_custom_call.1} parent=5 // pred_region
        %s1483 = ssub.s32 %s11, 2
        // Predicated region
        $region41: #{tpu_custom_call.1} parent=39 // pred_check
          %p1484 = pneg %p108
        $region42: #{tpu_custom_call.1} parent=39 // pred_check_branch
          %1486 = sbr.rel (%p1484) target = $region44
        $region43: #{tpu_custom_call.1} parent=39 // pred_region
          %s1487 = smul.u32 2, %s23
          %p1488 = scmp.lt.s32.totalorder %s22, 1
          %s1489 = scalar_select %p1488, %s22, 1
          %p1490 = scmp.lt.s32.totalorder %s1487, 1
          %s1491 = scalar_select %p1490, %s1487, 1
          %s1492 = smul.addr %s1489, 2
          %s1493 = sadd.s32 %s1491, %s1492
          %s1494 = smul.addr %s1493, 4
          %s1495 = scalar_lea.vmem %s2, %s1494
        $region44: #{tpu_custom_call.1} parent=39 // pred_fallthru
          _
      $region40: #{tpu_custom_call.1} parent=5 // pred_fallthru
        _
    $region6: #{tpu_custom_call.1} parent=1 // loop_footer
      %s15 = sadd.s32 1, %s11
    $region7: #{tpu_custom_call.1} parent=1 // loop_footer_branch
      %10 = sbr.rel target = $region3
    $region8: #{tpu_custom_call.1} parent=1 // loop_exit
      _
    %1496 = vsyncpa [#allocation3], 1
    %s1497 = scalar_lea.sflag [#allocation3], 1
    %1498 = vsyncpa %s1497, 1

</llo_original>
